<compile_context>
chip_gen: v7x
topology: tpu7x:2x2x1
jax: 0.10.0
libtpu: 0.0.40
codegen_flags: <defaults>
</compile_context>

<pallas_src>
import jax
import jax.numpy as jnp
from jax.experimental import pallas as pl
from jax.experimental.pallas import tpu as pltpu


NEG_SLOPE = 0.01  # torch.nn.LeakyReLU default


def _leaky_relu(x):
    return jnp.where(x >= 0, x, NEG_SLOPE * x)


def _round_up(x, m):
    return ((x + m - 1) // m) * m


def _pick_tiles(n, tm_req, tk_req):
    """Choose (tm, tk) as multiples of 128; keep >=2 row steps when possible."""
    n128 = _round_up(n, 128)
    tk = max(128, min(_round_up(tk_req, 128), n128))
    tk = (tk // 128) * 128
    tm = max(128, min(_round_up(tm_req, 128), n128))
    tm = (tm // 128) * 128
    # Cap tm at ~N/2 so the "parallel" grid axis has >= 2 steps (v7x megacore).
    half = ((n128 // 2) // 128) * 128
    if half >= 128 and tm > half:
        tm = half
    return tm, tk


def _pad2(x, rows, cols):
    pr, pc = rows - x.shape[0], cols - x.shape[1]
    if pr == 0 and pc == 0:
        return x
    return jnp.pad(x, ((0, pr), (0, pc)))


def community_gcn_layer(mod_matrix, adj_matrix, node_embs, w_dense, w_gcn,
                        *, tm=512, tk=1024, compute_dtype=jnp.bfloat16):
    N, F = node_embs.shape
    D = w_gcn.shape[1]
    assert mod_matrix.shape == (N, N)
    assert adj_matrix.shape == (N, N)
    assert w_dense.shape == (N, D)

    out_dtype = node_embs.dtype

    # Hoisted tiny matmul (N, F) @ (F, D): XLA handles it fine; doing it inside
    # the tiled kernel wasted MXU pushes and a per-step f32->bf16 cast.
    support = jnp.dot(node_embs, w_gcn, preferred_element_type=jnp.float32)

    tm, tk = _pick_tiles(N, tm, tk)
    Mp = _round_up(N, tm)   # padded row extent
    Kp = _round_up(N, tk)   # padded reduction extent

    # Big (N, N) matrices: stream as-is (no wrapper-side dtype pass); pad only
    # if N is not a multiple of the tile sizes.
    mod = _pad2(mod_matrix, Mp, Kp)
    adj = _pad2(adj_matrix, Mp, Kp)
    # Small (N, D) operands: bf16 + VMEM-resident for the whole grid.
    wd = _pad2(w_dense, Kp, D).astype(compute_dtype)
    sup = _pad2(support, Kp, D).astype(compute_dtype)

    grid = (Mp // tm, Kp // tk)

    # VMEM budget (double-buffered streams + resident operands + accumulators).
    in_itemsize = jnp.dtype(mod.dtype).itemsize
    out_itemsize = jnp.dtype(out_dtype).itemsize
    est = (2 * 2 * tm * tk * in_itemsize          # mod + adj tiles, 2 buffers each
           + 2 * 2 * Kp * D * 2                   # resident W_dense + support (bf16)
           + 2 * tm * (2 * D) * out_itemsize      # packed output, 2 buffers
           + 2 * tm * D * 4)                      # f32 accumulators
    vmem_limit = int(min(max(int(1.5 * est) + (4 << 20), 32 << 20), 48 << 20))

    def kernel(mod_ref, adj_ref, wd_ref, sup_ref, packed_ref, comm_acc, gcn_acc):
        k = pl.program_id(1)

        @pl.when(k == 0)
        def _init():
            comm_acc[...] = jnp.zeros_like(comm_acc)
            gcn_acc[...] = jnp.zeros_like(gcn_acc)

        # Cast streamed f32 tiles to bf16 on the VPU (hidden under DMA/MXU).
        mod_t = mod_ref[...].astype(compute_dtype)
        adj_t = adj_ref[...].astype(compute_dtype)

        # Slice the K-rows of the resident (Kp, D) operands.
        koff = pl.multiple_of(k * tk, 128)
        wd_k = wd_ref[pl.ds(koff, tk), :]
        sup_k = sup_ref[pl.ds(koff, tk), :]

        # Partial sums, f32 accumulation on the MXU.
        comm_acc[...] += jnp.dot(mod_t, wd_k, preferred_element_type=jnp.float32)
        gcn_acc[...] += jnp.dot(adj_t, sup_k, preferred_element_type=jnp.float32)

        @pl.when(k == pl.num_programs(1) - 1)
        def _finalize():
            comm = _leaky_relu(comm_acc[...])
            out = _leaky_relu(gcn_acc[...]) + comm
            # Single lane-dense (tm, 2*D) = (tm, 128) store: [ out | comm ].
            packed_ref[...] = jnp.concatenate([out, comm], axis=-1).astype(
                packed_ref.dtype)

    packed = pl.pallas_call(
        kernel,
        out_shape=jax.ShapeDtypeStruct((Mp, 2 * D), out_dtype),
        grid=grid,
        in_specs=[
            pl.BlockSpec((tm, tk), lambda i, k: (i, k)),   # mod_matrix tile
            pl.BlockSpec((tm, tk), lambda i, k: (i, k)),   # adj_matrix tile
            pl.BlockSpec((Kp, D), lambda i, k: (0, 0)),    # W_dense (resident)
            pl.BlockSpec((Kp, D), lambda i, k: (0, 0)),    # support  (resident)
        ],
        # Same output block across the K axis -> resident; written only at k==last.
        out_specs=pl.BlockSpec((tm, 2 * D), lambda i, k: (i, 0)),
        scratch_shapes=[
            pltpu.VMEM((tm, D), jnp.float32),  # community accumulator
            pltpu.VMEM((tm, D), jnp.float32),  # gcn accumulator
        ],
        compiler_params=pltpu.CompilerParams(
            dimension_semantics=("parallel", "arbitrary"),
            vmem_limit_bytes=vmem_limit),
    )(mod, adj, wd, sup)

    out = packed[:N, :D]
    comm = packed[:N, D:]
    return out, comm


def _reference(mod_matrix, adj_matrix, node_embs, w_dense, w_gcn,
               compute_dtype=jnp.bfloat16):
    """Pure-JAX reference matching the kernel's bf16-input / f32-accumulate path."""
    b = lambda a: a.astype(compute_dtype).astype(jnp.float32)
    comm = _leaky_relu(b(mod_matrix) @ b(w_dense))
    support = jnp.dot(node_embs, w_gcn, preferred_element_type=jnp.float32)
    gcn = _leaky_relu(b(adj_matrix) @ b(support))
    return gcn + comm, comm


if __name__ == "__main__":
    # Module-consistent small shapes: num_nodes=512, input_dim=32, output_dim=64.
    # N=512 -> tm=256, tk=512: a (2, 1) grid (2 parallel row tiles, 1 K step).
    N, F, D = 512, 32, 64
    key = jax.random.PRNGKey(0)
    k1, k2, k3, k4, k5 = jax.random.split(key, 5)

    # Symmetric-ish modularity / adjacency matrices.
    mod_matrix = jax.random.normal(k1, (N, N), dtype=jnp.float32) * 0.1
    mod_matrix = 0.5 * (mod_matrix + mod_matrix.T)
    adj_matrix = jax.random.uniform(k2, (N, N), dtype=jnp.float32)
    adj_matrix = (adj_matrix + adj_matrix.T) / (2.0 * N)  # row-normalized-ish
    node_embs = jax.random.normal(k3, (N, F), dtype=jnp.float32)

    # Glorot-like parameter init (Dense: N->D, GCN: F->D), bias=False.
    w_dense = jax.random.normal(k4, (N, D), dtype=jnp.float32) * (1.0 / jnp.sqrt(N))
    w_gcn = jax.random.normal(k5, (F, D), dtype=jnp.float32) * (1.0 / jnp.sqrt(F))

    out, comm = community_gcn_layer(mod_matrix, adj_matrix, node_embs,
                                    w_dense, w_gcn)
    jax.block_until_ready((out, comm))

    ref_out, ref_comm = _reference(mod_matrix, adj_matrix, node_embs,
                                   w_dense, w_gcn)
    assert out.shape == (N, D) and comm.shape == (N, D)
    assert jnp.allclose(out, ref_out, atol=2e-3, rtol=2e-3)
    assert jnp.allclose(comm, ref_comm, atol=2e-3, rtol=2e-3)

    print("KERNEL_OK")
</pallas_src>

<mosaic_0001>
module attributes {stable_mosaic.version = 11 : i64} {
  func.func @kernel(%arg0: i32, %arg1: i32, %arg2: memref<256x512xf32, #tpu.memory_space<vmem>>, %arg3: memref<256x512xf32, #tpu.memory_space<vmem>>, %arg4: memref<512x64xbf16, #tpu.memory_space<vmem>>, %arg5: memref<512x64xbf16, #tpu.memory_space<vmem>>, %arg6: memref<256x128xf32, #tpu.memory_space<vmem>>, %arg7: memref<256x64xf32, #tpu.memory_space<vmem>>, %arg8: memref<256x64xf32, #tpu.memory_space<vmem>>) attributes {dimension_semantics = [#tpu.dimension_semantics<parallel>, #tpu.dimension_semantics<arbitrary>], iteration_bounds = array<i64: 2, 1>, scalar_prefetch = 0 : i64, scratch_operands = 2 : i64, tpu.core_type = #tpu.core_type<tc>, window_params = [{transform_indices = @transform_0, window_bounds = array<i64: 256, 512>}, {transform_indices = @transform_1, window_bounds = array<i64: 256, 512>}, {pipeline_mode = #tpu.pipeline_mode<synchronous>, transform_indices = @transform_2, window_bounds = array<i64: 512, 64>}, {pipeline_mode = #tpu.pipeline_mode<synchronous>, transform_indices = @transform_3, window_bounds = array<i64: 512, 64>}, {transform_indices = @transform_4, window_bounds = array<i64: 256, 128>}]} {
    %c0_i32 = arith.constant 0 : i32
    %0 = arith.cmpi eq, %arg1, %c0_i32 : i32
    %1 = arith.extui %0 : i1 to i32
    %c0_i32_0 = arith.constant 0 : i32
    %2 = arith.cmpi ne, %1, %c0_i32_0 : i32
    scf.if %2 {
      %cst_17 = arith.constant 0.000000e+00 : f32
      %24 = vector.broadcast %cst_17 : f32 to vector<256x64xf32>
      %c0_18 = arith.constant 0 : index
      %c0_19 = arith.constant 0 : index
      %25 = vector.load %arg7[%c0_18, %c0_19] : memref<256x64xf32, #tpu.memory_space<vmem>>, vector<256x64xf32>
      tpu.vector_store %arg7[%c0_18, %c0_19], %24 {strides = array<i32>} : memref<256x64xf32, #tpu.memory_space<vmem>>, vector<256x64xf32>,
      %cst_20 = arith.constant 0.000000e+00 : f32
      %26 = vector.broadcast %cst_20 : f32 to vector<256x64xf32>
      %c0_21 = arith.constant 0 : index
      %c0_22 = arith.constant 0 : index
      %27 = vector.load %arg8[%c0_21, %c0_22] : memref<256x64xf32, #tpu.memory_space<vmem>>, vector<256x64xf32>
      tpu.vector_store %arg8[%c0_21, %c0_22], %26 {strides = array<i32>} : memref<256x64xf32, #tpu.memory_space<vmem>>, vector<256x64xf32>,
    } else {
    }
    %c0 = arith.constant 0 : index
    %c0_1 = arith.constant 0 : index
    %3 = vector.load %arg2[%c0, %c0_1] : memref<256x512xf32, #tpu.memory_space<vmem>>, vector<256x512xf32>
    %4 = arith.truncf %3 : vector<256x512xf32> to vector<256x512xbf16>
    %c0_2 = arith.constant 0 : index
    %c0_3 = arith.constant 0 : index
    %5 = vector.load %arg3[%c0_2, %c0_3] : memref<256x512xf32, #tpu.memory_space<vmem>>, vector<256x512xf32>
    %6 = arith.truncf %5 : vector<256x512xf32> to vector<256x512xbf16>
    %c512_i32 = arith.constant 512 : i32
    %7 = arith.muli %arg1, %c512_i32 : i32
    %8 = tpu.assume_multiple %7, 128 : i32
    %9 = arith.index_cast %8 : i32 to index
    %c0_4 = arith.constant 0 : index
    %10 = vector.load %arg4[%9, %c0_4] : memref<512x64xbf16, #tpu.memory_space<vmem>>, vector<512x64xbf16>
    %11 = arith.index_cast %8 : i32 to index
    %c0_5 = arith.constant 0 : index
    %12 = vector.load %arg5[%11, %c0_5] : memref<512x64xbf16, #tpu.memory_space<vmem>>, vector<512x64xbf16>
    %c0_6 = arith.constant 0 : index
    %c0_7 = arith.constant 0 : index
    %13 = vector.load %arg7[%c0_6, %c0_7] : memref<256x64xf32, #tpu.memory_space<vmem>>, vector<256x64xf32>
    %cst = arith.constant dense<0.000000e+00> : vector<256x64xf32>
    %14 = tpu.matmul %4, %10, %cst {dimension_numbers = #tpu.dot_dimension_numbers<[1], [0], [0], [1], [0, 0, 1, 1], [], []>} : vector<256x512xbf16>, vector<512x64xbf16>, vector<256x64xf32> -> vector<256x64xf32>
    %15 = arith.addf %13, %14 : vector<256x64xf32>
    %c0_8 = arith.constant 0 : index
    %c0_9 = arith.constant 0 : index
    %16 = vector.load %arg7[%c0_8, %c0_9] : memref<256x64xf32, #tpu.memory_space<vmem>>, vector<256x64xf32>
    tpu.vector_store %arg7[%c0_8, %c0_9], %15 {strides = array<i32>} : memref<256x64xf32, #tpu.memory_space<vmem>>, vector<256x64xf32>,
    %c0_10 = arith.constant 0 : index
    %c0_11 = arith.constant 0 : index
    %17 = vector.load %arg8[%c0_10, %c0_11] : memref<256x64xf32, #tpu.memory_space<vmem>>, vector<256x64xf32>
    %cst_12 = arith.constant dense<0.000000e+00> : vector<256x64xf32>
    %18 = tpu.matmul %6, %12, %cst_12 {dimension_numbers = #tpu.dot_dimension_numbers<[1], [0], [0], [1], [0, 0, 1, 1], [], []>} : vector<256x512xbf16>, vector<512x64xbf16>, vector<256x64xf32> -> vector<256x64xf32>
    %19 = arith.addf %17, %18 : vector<256x64xf32>
    %c0_13 = arith.constant 0 : index
    %c0_14 = arith.constant 0 : index
    %20 = vector.load %arg8[%c0_13, %c0_14] : memref<256x64xf32, #tpu.memory_space<vmem>>, vector<256x64xf32>
    tpu.vector_store %arg8[%c0_13, %c0_14], %19 {strides = array<i32>} : memref<256x64xf32, #tpu.memory_space<vmem>>, vector<256x64xf32>,
    %c0_i32_15 = arith.constant 0 : i32
    %21 = arith.cmpi eq, %arg1, %c0_i32_15 : i32
    %22 = arith.extui %21 : i1 to i32
    %c0_i32_16 = arith.constant 0 : i32
    %23 = arith.cmpi ne, %22, %c0_i32_16 : i32
    scf.if %23 {
      %c0_17 = arith.constant 0 : index
      %c0_18 = arith.constant 0 : index
      %24 = vector.load %arg7[%c0_17, %c0_18] : memref<256x64xf32, #tpu.memory_space<vmem>>, vector<256x64xf32>
      %cst_19 = arith.constant 0.000000e+00 : f32
      %25 = vector.broadcast %cst_19 : f32 to vector<256x64xf32>
      %26 = arith.cmpf oge, %24, %25 : vector<256x64xf32>
      %cst_20 = arith.constant 0.00999999977 : f32
      %27 = vector.broadcast %cst_20 : f32 to vector<256x64xf32>
      %28 = arith.mulf %27, %24 : vector<256x64xf32>
      %29 = arith.select %26, %24, %28 : vector<256x64xi1>, vector<256x64xf32>
      %c0_21 = arith.constant 0 : index
      %c0_22 = arith.constant 0 : index
      %30 = vector.load %arg8[%c0_21, %c0_22] : memref<256x64xf32, #tpu.memory_space<vmem>>, vector<256x64xf32>
      %cst_23 = arith.constant 0.000000e+00 : f32
      %31 = vector.broadcast %cst_23 : f32 to vector<256x64xf32>
      %32 = arith.cmpf oge, %30, %31 : vector<256x64xf32>
      %cst_24 = arith.constant 0.00999999977 : f32
      %33 = vector.broadcast %cst_24 : f32 to vector<256x64xf32>
      %34 = arith.mulf %33, %30 : vector<256x64xf32>
      %35 = arith.select %32, %30, %34 : vector<256x64xi1>, vector<256x64xf32>
      %36 = arith.addf %35, %29 : vector<256x64xf32>
      %37 = tpu.concatenate %36, %29 in 1 : vector<256x64xf32>, vector<256x64xf32> -> vector<256x128xf32>
      %c0_25 = arith.constant 0 : index
      %c0_26 = arith.constant 0 : index
      %38 = vector.load %arg6[%c0_25, %c0_26] : memref<256x128xf32, #tpu.memory_space<vmem>>, vector<256x128xf32>
      tpu.vector_store %arg6[%c0_25, %c0_26], %37 {strides = array<i32>} : memref<256x128xf32, #tpu.memory_space<vmem>>, vector<256x128xf32>,
    } else {
    }
    return
  }
  func.func @transform_0(%arg0: i32, %arg1: i32) -> (i32, i32) {
    %c0_i32 = arith.constant 0 : i32
    return %arg0, %arg1 : i32, i32
  }
  func.func @transform_1(%arg0: i32, %arg1: i32) -> (i32, i32) {
    %c0_i32 = arith.constant 0 : i32
    return %arg0, %arg1 : i32, i32
  }
  func.func @transform_2(%arg0: i32, %arg1: i32) -> (i32, i32) {
    %c0_i32 = arith.constant 0 : i32
    %c0_i32_0 = arith.constant 0 : i32
    %c0_i32_1 = arith.constant 0 : i32
    return %c0_i32, %c0_i32_0 : i32, i32
  }
  func.func @transform_3(%arg0: i32, %arg1: i32) -> (i32, i32) {
    %c0_i32 = arith.constant 0 : i32
    %c0_i32_0 = arith.constant 0 : i32
    %c0_i32_1 = arith.constant 0 : i32
    return %c0_i32, %c0_i32_0 : i32, i32
  }
  func.func @transform_4(%arg0: i32, %arg1: i32) -> (i32, i32) {
    %c0_i32 = arith.constant 0 : i32
    %c0_i32_0 = arith.constant 0 : i32
    return %arg0, %c0_i32 : i32, i32
  }
}

</mosaic_0001>

<llo_original>
// kernel: tpu_custom_call.1
$region0: #{tpu_custom_call.1}
  #allocation0 [shape = 'u32[]', space=smem, size = 0x4, offset = 0x4, fixed_abs, tag = 'smem constant byte address 0x4 - core index']
  #allocation1 [shape = 'u32[144,128]{1,0:T(1,128)}', space=vmem, size = 0x12000, scoped, tag = 'internal scratch']
  #allocation2 [shape = 'f32[256,64]{1,0:T(8,128)}', space=vmem, size = 0x20000, scoped, tag = 'scratch operand']
  #allocation3 [shape = 'f32[256,64]{1,0:T(8,128)}', space=vmem, size = 0x20000, scoped, tag = 'scratch operand']
  %s0 = inlined_call_operand.hbm [shape: f32[512,512], index: 0, kind: input, shape index: {}]
  %s1 = inlined_call_operand.hbm [shape: f32[512,512], index: 1, kind: input, shape index: {}]
  %s2 = inlined_call_operand.vmem [shape: bf16[512,64], index: 2, kind: input, shape index: {}]
  %s3 = inlined_call_operand.vmem [shape: bf16[512,64], index: 3, kind: input, shape index: {}]
  %s4 = inlined_call_operand.hbm [shape: f32[512,128], index: 4, kind: output, shape index: {}]
  %s5 = sld [smem:[#allocation0]]
  $region65: #{tpu_custom_call.1} parent=0
    _
  %s7 = ssub.s32 1, %s5
  %s8 = scalar_select 0, %s7, %s5
  $region1: #{tpu_custom_call.1} parent=0
    #allocation4 [shape = 'u8[1048576]{0}', space=vmem, size = 0x100000, scoped, tag = 'input window, operand 0']
    #allocation5 [shape = 's32[2]{0}', space=sflag, size = 0x8, scoped, tag = 'scoped memory for tpu_custom_call.1']
    #allocation6 [shape = 's32[2]{0}', space=sflag, size = 0x8, scoped, tag = 'scoped memory for tpu_custom_call.1']
    #allocation7 [shape = 'u8[1048576]{0}', space=vmem, size = 0x100000, scoped, tag = 'input window, operand 1']
    #allocation8 [shape = 's32[2]{0}', space=sflag, size = 0x8, scoped, tag = 'scoped memory for tpu_custom_call.1']
    #allocation9 [shape = 'u8[262144]{0}', space=vmem, size = 0x40000, scoped, tag = 'output window, operand 0']
    %9 = vsyncpa [#allocation5], 0
    %s10 = scalar_lea.sflag [#allocation5], 1
    %11 = vsyncpa %s10, 0
    %12 = vsyncpa [#allocation8], 0
    %s13 = scalar_lea.sflag [#allocation8], 1
    %14 = vsyncpa %s13, 0
    %15 = vsyncpa [#allocation6], 0
    %s16 = scalar_lea.sflag [#allocation6], 1
    %17 = vsyncpa %s16, 0
    loop: start=0, step=1, limit=4
    $region2: #{tpu_custom_call.1} parent=1 // loop_pre_header
      _
    $region3: #{tpu_custom_call.1} parent=1 // loop_header
      %s19 = sphi 0, %s23
      %p20 = scmp.ge.s32.totalorder %s19, 4
      %s26 = sphi 0, %s38
      %s27 = sphi 0, %s34
      %s28 = sphi 0, %s26
      %s29 = sphi 0, %s27
      %s30 = sphi 0, %s28
      %s31 = sphi 0, %s29
      %s43 = sphi 0, %s45
      %s46 = sphi 0, %s43
      %s47 = sphi 0, %s46
      %s63 = sphi 0, %s47
      %s71 = sphi 0, %s73
      %s74 = sphi 0, %s71
      %s75 = sphi 0, %s74
      %s91 = sphi 0, %s75
      %s95 = sphi 0, %s95
      %s97 = sphi 0, %s95
      %s98 = sphi 0, %s97
      %s112 = sphi 0, %s98
      %s116 = sphi 0, %s116
      %s118 = sphi 0, %s116
      %s119 = sphi 0, %s118
      %s133 = sphi 0, %s119
      %s139 = sphi 0, %s141
      %s142 = sphi 0, %s139
      %s143 = sphi 0, %s142
      %s159 = sphi 0, %s143
    $region4: #{tpu_custom_call.1} parent=1 // loop_header_branch
      %22 = sbr.rel (%p20) target = $region8
    $region5: #{tpu_custom_call.1} parent=1 // loop_body
      %s24 = ssub.s32 %s19, 1
      %s25 = ssub.s32 %s19, 2
      %s32 = sadd.s32 1, %s27
      %p33 = scmp.ge.s32.totalorder %s32, 1
      %s34 = scalar_select %p33, 0, %s32
      %s35 = sadd.s32 1, %s26
      %s36 = scalar_select %p33, %s35, %s26
      %p37 = scmp.ge.s32.totalorder %s36, 2
      %s38 = scalar_select %p37, 0, %s36
      %s39 = ssub.s32 %s26, %s38
      %s40 = ssub.s32 %s27, %s34
      %s41 = sor.u32 %s39, %s40
      %p42 = scmp.eq.s32.totalorder %s41, 0
      %s44 = sadd.s32 %s43, 1
      %s45 = scalar_select %p42, %s43, %s44
      %p48 = pneg %p42
      %p49 = scmp.eq.s32.totalorder %s19, 1
      %p50 = por %p48, %p49
      %p51 = scmp.ne.s32.totalorder %s43, %s46
      %p52 = scmp.eq.s32.totalorder %s19, 0
      %p53 = por %p51, %p52
      %p54 = scmp.ne.s32.totalorder %s43, %s46
      %p55 = scmp.eq.s32.totalorder %s24, 1
      %p56 = por %p54, %p55
      %p57 = scmp.ne.s32.totalorder %s46, %s47
      %p58 = scmp.eq.s32.totalorder %s24, 0
      %p59 = por %p57, %p58
      %p60 = scmp.ne.s32.totalorder %s46, %s47
      %p61 = scmp.eq.s32.totalorder %s25, 1
      %p62 = por %p60, %p61
      %p64 = scmp.ne.s32.totalorder %s47, %s63
      %p65 = scmp.eq.s32.totalorder %s25, 0
      %p66 = por %p64, %p65
      %s67 = ssub.s32 %s26, %s38
      %s68 = ssub.s32 %s27, %s34
      %s69 = sor.u32 %s67, %s68
      %p70 = scmp.eq.s32.totalorder %s69, 0
      %s72 = sadd.s32 %s71, 1
      %s73 = scalar_select %p70, %s71, %s72
      %p76 = pneg %p70
      %p77 = scmp.eq.s32.totalorder %s19, 1
      %p78 = por %p76, %p77
      %p79 = scmp.ne.s32.totalorder %s71, %s74
      %p80 = scmp.eq.s32.totalorder %s19, 0
      %p81 = por %p79, %p80
      %p82 = scmp.ne.s32.totalorder %s71, %s74
      %p83 = scmp.eq.s32.totalorder %s24, 1
      %p84 = por %p82, %p83
      %p85 = scmp.ne.s32.totalorder %s74, %s75
      %p86 = scmp.eq.s32.totalorder %s24, 0
      %p87 = por %p85, %p86
      %p88 = scmp.ne.s32.totalorder %s74, %s75
      %p89 = scmp.eq.s32.totalorder %s25, 1
      %p90 = por %p88, %p89
      %p92 = scmp.ne.s32.totalorder %s75, %s91
      %p93 = scmp.eq.s32.totalorder %s25, 0
      %p94 = por %p92, %p93
      %s96 = sadd.s32 %s95, 1
      %p99 = scmp.eq.s32.totalorder %s19, 1
      %p100 = scmp.ne.s32.totalorder %s95, %s97
      %p101 = scmp.eq.s32.totalorder %s19, 0
      %p102 = por %p100, %p101
      %p103 = scmp.ne.s32.totalorder %s95, %s97
      %p104 = scmp.eq.s32.totalorder %s24, 1
      %p105 = por %p103, %p104
      %p106 = scmp.ne.s32.totalorder %s97, %s98
      %p107 = scmp.eq.s32.totalorder %s24, 0
      %p108 = por %p106, %p107
      %p109 = scmp.ne.s32.totalorder %s97, %s98
      %p110 = scmp.eq.s32.totalorder %s25, 1
      %p111 = por %p109, %p110
      %p113 = scmp.ne.s32.totalorder %s98, %s112
      %p114 = scmp.eq.s32.totalorder %s25, 0
      %p115 = por %p113, %p114
      %s117 = sadd.s32 %s116, 1
      %p120 = scmp.eq.s32.totalorder %s19, 1
      %p121 = scmp.ne.s32.totalorder %s116, %s118
      %p122 = scmp.eq.s32.totalorder %s19, 0
      %p123 = por %p121, %p122
      %p124 = scmp.ne.s32.totalorder %s116, %s118
      %p125 = scmp.eq.s32.totalorder %s24, 1
      %p126 = por %p124, %p125
      %p127 = scmp.ne.s32.totalorder %s118, %s119
      %p128 = scmp.eq.s32.totalorder %s24, 0
      %p129 = por %p127, %p128
      %p130 = scmp.ne.s32.totalorder %s118, %s119
      %p131 = scmp.eq.s32.totalorder %s25, 1
      %p132 = por %p130, %p131
      %p134 = scmp.ne.s32.totalorder %s119, %s133
      %p135 = scmp.eq.s32.totalorder %s25, 0
      %p136 = por %p134, %p135
      %s137 = ssub.s32 %s26, %s38
      %p138 = scmp.eq.s32.totalorder %s137, 0
      %s140 = sadd.s32 %s139, 1
      %s141 = scalar_select %p138, %s139, %s140
      %p144 = pneg %p138
      %p145 = scmp.eq.s32.totalorder %s19, 1
      %p146 = por %p144, %p145
      %p147 = scmp.ne.s32.totalorder %s139, %s142
      %p148 = scmp.eq.s32.totalorder %s19, 0
      %p149 = por %p147, %p148
      %p150 = scmp.ne.s32.totalorder %s139, %s142
      %p151 = scmp.eq.s32.totalorder %s24, 1
      %p152 = por %p150, %p151
      %p153 = scmp.ne.s32.totalorder %s142, %s143
      %p154 = scmp.eq.s32.totalorder %s24, 0
      %p155 = por %p153, %p154
      %p156 = scmp.ne.s32.totalorder %s142, %s143
      %p157 = scmp.eq.s32.totalorder %s25, 1
      %p158 = por %p156, %p157
      %p160 = scmp.ne.s32.totalorder %s143, %s159
      %p161 = scmp.eq.s32.totalorder %s25, 0
      %p162 = por %p160, %p161
      %p163 = scmp.le.s32.totalorder 1, %s19
      %p164 = scmp.lt.s32.totalorder %s19, 3
      %p165 = pnand %p163, %p164
      %p166 = pneg %p165
      // Predicated region
      $region9: #{tpu_custom_call.1} parent=5 // pred_check
        _
      $region10: #{tpu_custom_call.1} parent=5 // pred_check_branch
        %168 = sbr.rel (%p165) target = $region12
      $region11: #{tpu_custom_call.1} parent=5 // pred_region
        %s169 = ssub.s32 %s19, 1
        // Predicated region
        $region13: #{tpu_custom_call.1} parent=11 // pred_check
          %p170 = pneg %p108
        $region14: #{tpu_custom_call.1} parent=11 // pred_check_branch
          %172 = sbr.rel (%p170) target = $region16
        $region15: #{tpu_custom_call.1} parent=11 // pred_region
          _
        $region16: #{tpu_custom_call.1} parent=11 // pred_fallthru
          _
        // Predicated region
        $region17: #{tpu_custom_call.1} parent=11 // pred_check
          %p173 = pneg %p129
        $region18: #{tpu_custom_call.1} parent=11 // pred_check_branch
          %175 = sbr.rel (%p173) target = $region20
        $region19: #{tpu_custom_call.1} parent=11 // pred_region
          _
        $region20: #{tpu_custom_call.1} parent=11 // pred_fallthru
          _
      $region12: #{tpu_custom_call.1} parent=5 // pred_fallthru
        _
      %p176 = scmp.lt.s32.totalorder %s19, 2
      // Predicated region
      $region21: #{tpu_custom_call.1} parent=5 // pred_check
        %p177 = pneg %p176
      $region22: #{tpu_custom_call.1} parent=5 // pred_check_branch
        %179 = sbr.rel (%p177) target = $region24
      $region23: #{tpu_custom_call.1} parent=5 // pred_region
        // Predicated region
        $region25: #{tpu_custom_call.1} parent=23 // pred_check
          %p180 = pneg %p53
        $region26: #{tpu_custom_call.1} parent=23 // pred_check_branch
          %182 = sbr.rel (%p180) target = $region28
        $region27: #{tpu_custom_call.1} parent=23 // pred_region
          %s183 = sand.u32 %s43, 1
          %s184 = scalar_lea.sflag [#allocation5], %s183
          %s185 = sand.u32 %s43, 1
          %s186 = smul.addr %s185, 1024
          %s187 = scalar_lea.vmem [#allocation4], %s186
          %s188 = smul.u32 32, %s26
          %s189 = smul.u32 4, %s27
          %s191 = ssub.s32 16384, 16384
          %192 = vsyncadd %s184, %s191
          %s193 = smul.addr %s188, 4
          %s194 = sadd.s32 %s189, %s193
          %s195 = smul.addr %s194, 128
          %s196 = scalar_lea.hbm %s0, %s195
          %s197 = sshll.u32 %s187, 4
          %s198 = int_to_ptr.vmem [resolvable:$true] %s197
          %203 = dma.hbm_to_vmem [thread:$0]  %s196, 16384, %s198, %s184, 512, 512, 32
        $region28: #{tpu_custom_call.1} parent=23 // pred_fallthru
          _
        // Predicated region
        $region29: #{tpu_custom_call.1} parent=23 // pred_check
          %p204 = pneg %p81
        $region30: #{tpu_custom_call.1} parent=23 // pred_check_branch
          %206 = sbr.rel (%p204) target = $region32
        $region31: #{tpu_custom_call.1} parent=23 // pred_region
          %s207 = sand.u32 %s71, 1
          %s208 = scalar_lea.sflag [#allocation8], %s207
          %s209 = sand.u32 %s71, 1
          %s210 = smul.addr %s209, 1024
          %s211 = scalar_lea.vmem [#allocation7], %s210
          %s212 = smul.u32 32, %s26
          %s213 = smul.u32 4, %s27
          %s215 = ssub.s32 16384, 16384
          %216 = vsyncadd %s208, %s215
          %s217 = smul.addr %s212, 4
          %s218 = sadd.s32 %s213, %s217
          %s219 = smul.addr %s218, 128
          %s220 = scalar_lea.hbm %s1, %s219
          %s221 = sshll.u32 %s211, 4
          %s222 = int_to_ptr.vmem [resolvable:$true] %s221
          %227 = dma.hbm_to_vmem [thread:$0]  %s220, 16384, %s222, %s208, 512, 512, 32
        $region32: #{tpu_custom_call.1} parent=23 // pred_fallthru
          _
      $region24: #{tpu_custom_call.1} parent=5 // pred_fallthru
        _
      %p228 = scmp.le.s32.totalorder 1, %s19
      %p229 = scmp.lt.s32.totalorder %s19, 3
      %p230 = pnand %p228, %p229
      %p231 = pneg %p230
      // Predicated region
      $region33: #{tpu_custom_call.1} parent=5 // pred_check
        _
      $region34: #{tpu_custom_call.1} parent=5 // pred_check_branch
        %233 = sbr.rel (%p230) target = $region36
      $region35: #{tpu_custom_call.1} parent=5 // pred_region
        %s234 = ssub.s32 %s19, 1
        %s235 = sand.u32 %s46, 1
        %s236 = scalar_lea.sflag [#allocation5], %s235
        %s237 = sand.u32 %s46, 1
        %s238 = smul.addr %s237, 1024
        %s239 = scalar_lea.vmem [#allocation4], %s238
        // Predicated region
        $region37: #{tpu_custom_call.1} parent=35 // pred_check
          %p240 = pneg %p59
        $region38: #{tpu_custom_call.1} parent=35 // pred_check_branch
          %242 = sbr.rel (%p240) target = $region40
        $region39: #{tpu_custom_call.1} parent=35 // pred_region
          %243 = dma.done %s236, 16384
        $region40: #{tpu_custom_call.1} parent=35 // pred_fallthru
          _
        %s244 = sand.u32 %s74, 1
        %s245 = scalar_lea.sflag [#allocation8], %s244
        %s246 = sand.u32 %s74, 1
        %s247 = smul.addr %s246, 1024
        %s248 = scalar_lea.vmem [#allocation7], %s247
        // Predicated region
        $region41: #{tpu_custom_call.1} parent=35 // pred_check
          %p249 = pneg %p87
        $region42: #{tpu_custom_call.1} parent=35 // pred_check_branch
          %251 = sbr.rel (%p249) target = $region44
        $region43: #{tpu_custom_call.1} parent=35 // pred_region
          %252 = dma.done %s245, 16384
        $region44: #{tpu_custom_call.1} parent=35 // pred_fallthru
          _
        %s253 = sand.u32 %s46, 1
        %s254 = scalar_lea.sflag [#allocation5], %s253
        %s255 = sand.u32 %s46, 1
        %s256 = smul.addr %s255, 1024
        %s257 = scalar_lea.vmem [#allocation4], %s256
        %p258 = pneg %p59
        %p259 = pneg %p56
        %s260 = sand.u32 %s74, 1
        %s261 = scalar_lea.sflag [#allocation8], %s260
        %s262 = sand.u32 %s74, 1
        %s263 = smul.addr %s262, 1024
        %s264 = scalar_lea.vmem [#allocation7], %s263
        %p265 = pneg %p87
        %p266 = pneg %p84
        %p267 = pneg %p108
        %p268 = pneg %p105
        %p269 = pneg %p129
        %p270 = pneg %p126
        %p271 = pneg %p155
        %p272 = pneg %p152
        %s273 = sand.u32 %s142, 1
        %s274 = scalar_lea.sflag [#allocation6], %s273
        %s275 = sand.u32 %s142, 1
        %s276 = smul.addr %s275, 256
        %s277 = scalar_lea.vmem [#allocation9], %s276
        %s278 = smul.u32 32, %s28
        %s279 = smul.u32 4, %s29
        %s280 = smul.u32 32, %s28
        %s281 = smul.u32 4, %s29
        %s282 = smul.u32 32, %s28
        %p284 = scmp.eq.s32.totalorder %s29, 0
        // Predicated region
        $region45: #{tpu_custom_call.1} parent=35 // pred_check
          %p285 = pneg %p284
        $region46: #{tpu_custom_call.1} parent=35 // pred_check_branch
          %287 = sbr.rel (%p285) target = $region48
        $region47: #{tpu_custom_call.1} parent=35 // pred_region
          %vm288 = vcmask 523264
          %289 = vst.msk [vmem:[#allocation2] sm:$0xff] %vm288, 0.0
          %290 = vst.msk [vmem:[#allocation2 + $0x8] sm:$0xff] %vm288, 0.0
          %291 = vst.msk [vmem:[#allocation2 + $0x10] sm:$0xff] %vm288, 0.0
          %292 = vst.msk [vmem:[#allocation2 + $0x18] sm:$0xff] %vm288, 0.0
          %293 = vst.msk [vmem:[#allocation2 + $0x20] sm:$0xff] %vm288, 0.0
          %294 = vst.msk [vmem:[#allocation2 + $0x28] sm:$0xff] %vm288, 0.0
          %295 = vst.msk [vmem:[#allocation2 + $0x30] sm:$0xff] %vm288, 0.0
          %296 = vst.msk [vmem:[#allocation2 + $0x38] sm:$0xff] %vm288, 0.0
          %297 = vst.msk [vmem:[#allocation2 + $0x40] sm:$0xff] %vm288, 0.0
          %298 = vst.msk [vmem:[#allocation2 + $0x48] sm:$0xff] %vm288, 0.0
          %299 = vst.msk [vmem:[#allocation2 + $0x50] sm:$0xff] %vm288, 0.0
          %300 = vst.msk [vmem:[#allocation2 + $0x58] sm:$0xff] %vm288, 0.0
          %301 = vst.msk [vmem:[#allocation2 + $0x60] sm:$0xff] %vm288, 0.0
          %302 = vst.msk [vmem:[#allocation2 + $0x68] sm:$0xff] %vm288, 0.0
          %303 = vst.msk [vmem:[#allocation2 + $0x70] sm:$0xff] %vm288, 0.0
          %304 = vst.msk [vmem:[#allocation2 + $0x78] sm:$0xff] %vm288, 0.0
          %305 = vst.msk [vmem:[#allocation2 + $0x80] sm:$0xff] %vm288, 0.0
          %306 = vst.msk [vmem:[#allocation2 + $0x88] sm:$0xff] %vm288, 0.0
          %307 = vst.msk [vmem:[#allocation2 + $0x90] sm:$0xff] %vm288, 0.0
          %308 = vst.msk [vmem:[#allocation2 + $0x98] sm:$0xff] %vm288, 0.0
          %309 = vst.msk [vmem:[#allocation2 + $0xa0] sm:$0xff] %vm288, 0.0
          %310 = vst.msk [vmem:[#allocation2 + $0xa8] sm:$0xff] %vm288, 0.0
          %311 = vst.msk [vmem:[#allocation2 + $0xb0] sm:$0xff] %vm288, 0.0
          %312 = vst.msk [vmem:[#allocation2 + $0xb8] sm:$0xff] %vm288, 0.0
          %313 = vst.msk [vmem:[#allocation2 + $0xc0] sm:$0xff] %vm288, 0.0
          %314 = vst.msk [vmem:[#allocation2 + $0xc8] sm:$0xff] %vm288, 0.0
          %315 = vst.msk [vmem:[#allocation2 + $0xd0] sm:$0xff] %vm288, 0.0
          %316 = vst.msk [vmem:[#allocation2 + $0xd8] sm:$0xff] %vm288, 0.0
          %317 = vst.msk [vmem:[#allocation2 + $0xe0] sm:$0xff] %vm288, 0.0
          %318 = vst.msk [vmem:[#allocation2 + $0xe8] sm:$0xff] %vm288, 0.0
          %319 = vst.msk [vmem:[#allocation2 + $0xf0] sm:$0xff] %vm288, 0.0
          %320 = vst.msk [vmem:[#allocation2 + $0xf8] sm:$0xff] %vm288, 0.0
          %321 = vst.msk [vmem:[#allocation3] sm:$0xff] %vm288, 0.0
          %322 = vst.msk [vmem:[#allocation3 + $0x8] sm:$0xff] %vm288, 0.0
          %323 = vst.msk [vmem:[#allocation3 + $0x10] sm:$0xff] %vm288, 0.0
          %324 = vst.msk [vmem:[#allocation3 + $0x18] sm:$0xff] %vm288, 0.0
          %325 = vst.msk [vmem:[#allocation3 + $0x20] sm:$0xff] %vm288, 0.0
          %326 = vst.msk [vmem:[#allocation3 + $0x28] sm:$0xff] %vm288, 0.0
          %327 = vst.msk [vmem:[#allocation3 + $0x30] sm:$0xff] %vm288, 0.0
          %328 = vst.msk [vmem:[#allocation3 + $0x38] sm:$0xff] %vm288, 0.0
          %329 = vst.msk [vmem:[#allocation3 + $0x40] sm:$0xff] %vm288, 0.0
          %330 = vst.msk [vmem:[#allocation3 + $0x48] sm:$0xff] %vm288, 0.0
          %331 = vst.msk [vmem:[#allocation3 + $0x50] sm:$0xff] %vm288, 0.0
          %332 = vst.msk [vmem:[#allocation3 + $0x58] sm:$0xff] %vm288, 0.0
          %333 = vst.msk [vmem:[#allocation3 + $0x60] sm:$0xff] %vm288, 0.0
          %334 = vst.msk [vmem:[#allocation3 + $0x68] sm:$0xff] %vm288, 0.0
          %335 = vst.msk [vmem:[#allocation3 + $0x70] sm:$0xff] %vm288, 0.0
          %336 = vst.msk [vmem:[#allocation3 + $0x78] sm:$0xff] %vm288, 0.0
          %337 = vst.msk [vmem:[#allocation3 + $0x80] sm:$0xff] %vm288, 0.0
          %338 = vst.msk [vmem:[#allocation3 + $0x88] sm:$0xff] %vm288, 0.0
          %339 = vst.msk [vmem:[#allocation3 + $0x90] sm:$0xff] %vm288, 0.0
          %340 = vst.msk [vmem:[#allocation3 + $0x98] sm:$0xff] %vm288, 0.0
          %341 = vst.msk [vmem:[#allocation3 + $0xa0] sm:$0xff] %vm288, 0.0
          %342 = vst.msk [vmem:[#allocation3 + $0xa8] sm:$0xff] %vm288, 0.0
          %343 = vst.msk [vmem:[#allocation3 + $0xb0] sm:$0xff] %vm288, 0.0
          %344 = vst.msk [vmem:[#allocation3 + $0xb8] sm:$0xff] %vm288, 0.0
          %345 = vst.msk [vmem:[#allocation3 + $0xc0] sm:$0xff] %vm288, 0.0
          %346 = vst.msk [vmem:[#allocation3 + $0xc8] sm:$0xff] %vm288, 0.0
          %347 = vst.msk [vmem:[#allocation3 + $0xd0] sm:$0xff] %vm288, 0.0
          %348 = vst.msk [vmem:[#allocation3 + $0xd8] sm:$0xff] %vm288, 0.0
          %349 = vst.msk [vmem:[#allocation3 + $0xe0] sm:$0xff] %vm288, 0.0
          %350 = vst.msk [vmem:[#allocation3 + $0xe8] sm:$0xff] %vm288, 0.0
          %351 = vst.msk [vmem:[#allocation3 + $0xf0] sm:$0xff] %vm288, 0.0
          %352 = vst.msk [vmem:[#allocation3 + $0xf8] sm:$0xff] %vm288, 0.0
        $region48: #{tpu_custom_call.1} parent=35 // pred_fallthru
          _
        %v353 = vld [vmem:[%s239] sm:$0xff]
        %v354 = vld [vmem:[%s239 + $0x8] sm:$0xff]
        %v355 = vld [vmem:[%s239 + $0x10] sm:$0xff]
        %v356 = vld [vmem:[%s239 + $0x18] sm:$0xff]
        %v357 = vld [vmem:[%s239 + $0x20] sm:$0xff]
        %v358 = vld [vmem:[%s239 + $0x28] sm:$0xff]
        %v359 = vld [vmem:[%s239 + $0x30] sm:$0xff]
        %v360 = vld [vmem:[%s239 + $0x38] sm:$0xff]
        %v361 = vld [vmem:[%s239 + $0x40] sm:$0xff]
        %v362 = vld [vmem:[%s239 + $0x48] sm:$0xff]
        %v363 = vld [vmem:[%s239 + $0x50] sm:$0xff]
        %v364 = vld [vmem:[%s239 + $0x58] sm:$0xff]
        %v365 = vld [vmem:[%s239 + $0x60] sm:$0xff]
        %v366 = vld [vmem:[%s239 + $0x68] sm:$0xff]
        %v367 = vld [vmem:[%s239 + $0x70] sm:$0xff]
        %v368 = vld [vmem:[%s239 + $0x78] sm:$0xff]
        %v369 = vld [vmem:[%s239 + $0x80] sm:$0xff]
        %v370 = vld [vmem:[%s239 + $0x88] sm:$0xff]
        %v371 = vld [vmem:[%s239 + $0x90] sm:$0xff]
        %v372 = vld [vmem:[%s239 + $0x98] sm:$0xff]
        %v373 = vld [vmem:[%s239 + $0xa0] sm:$0xff]
        %v374 = vld [vmem:[%s239 + $0xa8] sm:$0xff]
        %v375 = vld [vmem:[%s239 + $0xb0] sm:$0xff]
        %v376 = vld [vmem:[%s239 + $0xb8] sm:$0xff]
        %v377 = vld [vmem:[%s239 + $0xc0] sm:$0xff]
        %v378 = vld [vmem:[%s239 + $0xc8] sm:$0xff]
        %v379 = vld [vmem:[%s239 + $0xd0] sm:$0xff]
        %v380 = vld [vmem:[%s239 + $0xd8] sm:$0xff]
        %v381 = vld [vmem:[%s239 + $0xe0] sm:$0xff]
        %v382 = vld [vmem:[%s239 + $0xe8] sm:$0xff]
        %v383 = vld [vmem:[%s239 + $0xf0] sm:$0xff]
        %v384 = vld [vmem:[%s239 + $0xf8] sm:$0xff]
        %v385 = vld [vmem:[%s239 + $0x100] sm:$0xff]
        %v386 = vld [vmem:[%s239 + $0x108] sm:$0xff]
        %v387 = vld [vmem:[%s239 + $0x110] sm:$0xff]
        %v388 = vld [vmem:[%s239 + $0x118] sm:$0xff]
        %v389 = vld [vmem:[%s239 + $0x120] sm:$0xff]
        %v390 = vld [vmem:[%s239 + $0x128] sm:$0xff]
        %v391 = vld [vmem:[%s239 + $0x130] sm:$0xff]
        %v392 = vld [vmem:[%s239 + $0x138] sm:$0xff]
        %v393 = vld [vmem:[%s239 + $0x140] sm:$0xff]
        %v394 = vld [vmem:[%s239 + $0x148] sm:$0xff]
        %v395 = vld [vmem:[%s239 + $0x150] sm:$0xff]
        %v396 = vld [vmem:[%s239 + $0x158] sm:$0xff]
        %v397 = vld [vmem:[%s239 + $0x160] sm:$0xff]
        %v398 = vld [vmem:[%s239 + $0x168] sm:$0xff]
        %v399 = vld [vmem:[%s239 + $0x170] sm:$0xff]
        %v400 = vld [vmem:[%s239 + $0x178] sm:$0xff]
        %v401 = vld [vmem:[%s239 + $0x180] sm:$0xff]
        %v402 = vld [vmem:[%s239 + $0x188] sm:$0xff]
        %v403 = vld [vmem:[%s239 + $0x190] sm:$0xff]
        %v404 = vld [vmem:[%s239 + $0x198] sm:$0xff]
        %v405 = vld [vmem:[%s239 + $0x1a0] sm:$0xff]
        %v406 = vld [vmem:[%s239 + $0x1a8] sm:$0xff]
        %v407 = vld [vmem:[%s239 + $0x1b0] sm:$0xff]
        %v408 = vld [vmem:[%s239 + $0x1b8] sm:$0xff]
        %v409 = vld [vmem:[%s239 + $0x1c0] sm:$0xff]
        %v410 = vld [vmem:[%s239 + $0x1c8] sm:$0xff]
        %v411 = vld [vmem:[%s239 + $0x1d0] sm:$0xff]
        %v412 = vld [vmem:[%s239 + $0x1d8] sm:$0xff]
        %v413 = vld [vmem:[%s239 + $0x1e0] sm:$0xff]
        %v414 = vld [vmem:[%s239 + $0x1e8] sm:$0xff]
        %v415 = vld [vmem:[%s239 + $0x1f0] sm:$0xff]
        %v416 = vld [vmem:[%s239 + $0x1f8] sm:$0xff]
        %v417 = vld [vmem:[%s239 + $0x200] sm:$0xff]
        %v418 = vld [vmem:[%s239 + $0x208] sm:$0xff]
        %v419 = vld [vmem:[%s239 + $0x210] sm:$0xff]
        %v420 = vld [vmem:[%s239 + $0x218] sm:$0xff]
        %v421 = vld [vmem:[%s239 + $0x220] sm:$0xff]
        %v422 = vld [vmem:[%s239 + $0x228] sm:$0xff]
        %v423 = vld [vmem:[%s239 + $0x230] sm:$0xff]
        %v424 = vld [vmem:[%s239 + $0x238] sm:$0xff]
        %v425 = vld [vmem:[%s239 + $0x240] sm:$0xff]
        %v426 = vld [vmem:[%s239 + $0x248] sm:$0xff]
        %v427 = vld [vmem:[%s239 + $0x250] sm:$0xff]
        %v428 = vld [vmem:[%s239 + $0x258] sm:$0xff]
        %v429 = vld [vmem:[%s239 + $0x260] sm:$0xff]
        %v430 = vld [vmem:[%s239 + $0x268] sm:$0xff]
        %v431 = vld [vmem:[%s239 + $0x270] sm:$0xff]
        %v432 = vld [vmem:[%s239 + $0x278] sm:$0xff]
        %v433 = vld [vmem:[%s239 + $0x280] sm:$0xff]
        %v434 = vld [vmem:[%s239 + $0x288] sm:$0xff]
        %v435 = vld [vmem:[%s239 + $0x290] sm:$0xff]
        %v436 = vld [vmem:[%s239 + $0x298] sm:$0xff]
        %v437 = vld [vmem:[%s239 + $0x2a0] sm:$0xff]
        %v438 = vld [vmem:[%s239 + $0x2a8] sm:$0xff]
        %v439 = vld [vmem:[%s239 + $0x2b0] sm:$0xff]
        %v440 = vld [vmem:[%s239 + $0x2b8] sm:$0xff]
        %v441 = vld [vmem:[%s239 + $0x2c0] sm:$0xff]
        %v442 = vld [vmem:[%s239 + $0x2c8] sm:$0xff]
        %v443 = vld [vmem:[%s239 + $0x2d0] sm:$0xff]
        %v444 = vld [vmem:[%s239 + $0x2d8] sm:$0xff]
        %v445 = vld [vmem:[%s239 + $0x2e0] sm:$0xff]
        %v446 = vld [vmem:[%s239 + $0x2e8] sm:$0xff]
        %v447 = vld [vmem:[%s239 + $0x2f0] sm:$0xff]
        %v448 = vld [vmem:[%s239 + $0x2f8] sm:$0xff]
        %v449 = vld [vmem:[%s239 + $0x300] sm:$0xff]
        %v450 = vld [vmem:[%s239 + $0x308] sm:$0xff]
        %v451 = vld [vmem:[%s239 + $0x310] sm:$0xff]
        %v452 = vld [vmem:[%s239 + $0x318] sm:$0xff]
        %v453 = vld [vmem:[%s239 + $0x320] sm:$0xff]
        %v454 = vld [vmem:[%s239 + $0x328] sm:$0xff]
        %v455 = vld [vmem:[%s239 + $0x330] sm:$0xff]
        %v456 = vld [vmem:[%s239 + $0x338] sm:$0xff]
        %v457 = vld [vmem:[%s239 + $0x340] sm:$0xff]
        %v458 = vld [vmem:[%s239 + $0x348] sm:$0xff]
        %v459 = vld [vmem:[%s239 + $0x350] sm:$0xff]
        %v460 = vld [vmem:[%s239 + $0x358] sm:$0xff]
        %v461 = vld [vmem:[%s239 + $0x360] sm:$0xff]
        %v462 = vld [vmem:[%s239 + $0x368] sm:$0xff]
        %v463 = vld [vmem:[%s239 + $0x370] sm:$0xff]
        %v464 = vld [vmem:[%s239 + $0x378] sm:$0xff]
        %v465 = vld [vmem:[%s239 + $0x380] sm:$0xff]
        %v466 = vld [vmem:[%s239 + $0x388] sm:$0xff]
        %v467 = vld [vmem:[%s239 + $0x390] sm:$0xff]
        %v468 = vld [vmem:[%s239 + $0x398] sm:$0xff]
        %v469 = vld [vmem:[%s239 + $0x3a0] sm:$0xff]
        %v470 = vld [vmem:[%s239 + $0x3a8] sm:$0xff]
        %v471 = vld [vmem:[%s239 + $0x3b0] sm:$0xff]
        %v472 = vld [vmem:[%s239 + $0x3b8] sm:$0xff]
        %v473 = vld [vmem:[%s239 + $0x3c0] sm:$0xff]
        %v474 = vld [vmem:[%s239 + $0x3c8] sm:$0xff]
        %v475 = vld [vmem:[%s239 + $0x3d0] sm:$0xff]
        %v476 = vld [vmem:[%s239 + $0x3d8] sm:$0xff]
        %v477 = vld [vmem:[%s239 + $0x3e0] sm:$0xff]
        %v478 = vld [vmem:[%s239 + $0x3e8] sm:$0xff]
        %v479 = vld [vmem:[%s239 + $0x3f0] sm:$0xff]
        %v480 = vld [vmem:[%s239 + $0x3f8] sm:$0xff]
        %v481 = vpack.c.bf16 %v357, %v353
        %v482 = vpack.c.bf16 %v358, %v354
        %v483 = vpack.c.bf16 %v359, %v355
        %v484 = vpack.c.bf16 %v360, %v356
        %v485 = vpack.c.bf16 %v365, %v361
        %v486 = vpack.c.bf16 %v366, %v362
        %v487 = vpack.c.bf16 %v367, %v363
        %v488 = vpack.c.bf16 %v368, %v364
        %v489 = vpack.c.bf16 %v373, %v369
        %v490 = vpack.c.bf16 %v374, %v370
        %v491 = vpack.c.bf16 %v375, %v371
        %v492 = vpack.c.bf16 %v376, %v372
        %v493 = vpack.c.bf16 %v381, %v377
        %v494 = vpack.c.bf16 %v382, %v378
        %v495 = vpack.c.bf16 %v383, %v379
        %v496 = vpack.c.bf16 %v384, %v380
        %v497 = vpack.c.bf16 %v389, %v385
        %v498 = vpack.c.bf16 %v390, %v386
        %v499 = vpack.c.bf16 %v391, %v387
        %v500 = vpack.c.bf16 %v392, %v388
        %v501 = vpack.c.bf16 %v397, %v393
        %v502 = vpack.c.bf16 %v398, %v394
        %v503 = vpack.c.bf16 %v399, %v395
        %v504 = vpack.c.bf16 %v400, %v396
        %v505 = vpack.c.bf16 %v405, %v401
        %v506 = vpack.c.bf16 %v406, %v402
        %v507 = vpack.c.bf16 %v407, %v403
        %v508 = vpack.c.bf16 %v408, %v404
        %v509 = vpack.c.bf16 %v413, %v409
        %v510 = vpack.c.bf16 %v414, %v410
        %v511 = vpack.c.bf16 %v415, %v411
        %v512 = vpack.c.bf16 %v416, %v412
        %v513 = vpack.c.bf16 %v421, %v417
        %v514 = vpack.c.bf16 %v422, %v418
        %v515 = vpack.c.bf16 %v423, %v419
        %v516 = vpack.c.bf16 %v424, %v420
        %v517 = vpack.c.bf16 %v429, %v425
        %v518 = vpack.c.bf16 %v430, %v426
        %v519 = vpack.c.bf16 %v431, %v427
        %v520 = vpack.c.bf16 %v432, %v428
        %v521 = vpack.c.bf16 %v437, %v433
        %v522 = vpack.c.bf16 %v438, %v434
        %v523 = vpack.c.bf16 %v439, %v435
        %v524 = vpack.c.bf16 %v440, %v436
        %v525 = vpack.c.bf16 %v445, %v441
        %v526 = vpack.c.bf16 %v446, %v442
        %v527 = vpack.c.bf16 %v447, %v443
        %v528 = vpack.c.bf16 %v448, %v444
        %v529 = vpack.c.bf16 %v453, %v449
        %v530 = vpack.c.bf16 %v454, %v450
        %v531 = vpack.c.bf16 %v455, %v451
        %v532 = vpack.c.bf16 %v456, %v452
        %v533 = vpack.c.bf16 %v461, %v457
        %v534 = vpack.c.bf16 %v462, %v458
        %v535 = vpack.c.bf16 %v463, %v459
        %v536 = vpack.c.bf16 %v464, %v460
        %v537 = vpack.c.bf16 %v469, %v465
        %v538 = vpack.c.bf16 %v470, %v466
        %v539 = vpack.c.bf16 %v471, %v467
        %v540 = vpack.c.bf16 %v472, %v468
        %v541 = vpack.c.bf16 %v477, %v473
        %v542 = vpack.c.bf16 %v478, %v474
        %v543 = vpack.c.bf16 %v479, %v475
        %v544 = vpack.c.bf16 %v480, %v476
        %v545 = vld [vmem:[%s248] sm:$0xff]
        %v546 = vld [vmem:[%s248 + $0x8] sm:$0xff]
        %v547 = vld [vmem:[%s248 + $0x10] sm:$0xff]
        %v548 = vld [vmem:[%s248 + $0x18] sm:$0xff]
        %v549 = vld [vmem:[%s248 + $0x20] sm:$0xff]
        %v550 = vld [vmem:[%s248 + $0x28] sm:$0xff]
        %v551 = vld [vmem:[%s248 + $0x30] sm:$0xff]
        %v552 = vld [vmem:[%s248 + $0x38] sm:$0xff]
        %v553 = vld [vmem:[%s248 + $0x40] sm:$0xff]
        %v554 = vld [vmem:[%s248 + $0x48] sm:$0xff]
        %v555 = vld [vmem:[%s248 + $0x50] sm:$0xff]
        %v556 = vld [vmem:[%s248 + $0x58] sm:$0xff]
        %v557 = vld [vmem:[%s248 + $0x60] sm:$0xff]
        %v558 = vld [vmem:[%s248 + $0x68] sm:$0xff]
        %v559 = vld [vmem:[%s248 + $0x70] sm:$0xff]
        %v560 = vld [vmem:[%s248 + $0x78] sm:$0xff]
        %v561 = vld [vmem:[%s248 + $0x80] sm:$0xff]
        %v562 = vld [vmem:[%s248 + $0x88] sm:$0xff]
        %v563 = vld [vmem:[%s248 + $0x90] sm:$0xff]
        %v564 = vld [vmem:[%s248 + $0x98] sm:$0xff]
        %v565 = vld [vmem:[%s248 + $0xa0] sm:$0xff]
        %v566 = vld [vmem:[%s248 + $0xa8] sm:$0xff]
        %v567 = vld [vmem:[%s248 + $0xb0] sm:$0xff]
        %v568 = vld [vmem:[%s248 + $0xb8] sm:$0xff]
        %v569 = vld [vmem:[%s248 + $0xc0] sm:$0xff]
        %v570 = vld [vmem:[%s248 + $0xc8] sm:$0xff]
        %v571 = vld [vmem:[%s248 + $0xd0] sm:$0xff]
        %v572 = vld [vmem:[%s248 + $0xd8] sm:$0xff]
        %v573 = vld [vmem:[%s248 + $0xe0] sm:$0xff]
        %v574 = vld [vmem:[%s248 + $0xe8] sm:$0xff]
        %v575 = vld [vmem:[%s248 + $0xf0] sm:$0xff]
        %v576 = vld [vmem:[%s248 + $0xf8] sm:$0xff]
        %v577 = vld [vmem:[%s248 + $0x100] sm:$0xff]
        %v578 = vld [vmem:[%s248 + $0x108] sm:$0xff]
        %v579 = vld [vmem:[%s248 + $0x110] sm:$0xff]
        %v580 = vld [vmem:[%s248 + $0x118] sm:$0xff]
        %v581 = vld [vmem:[%s248 + $0x120] sm:$0xff]
        %v582 = vld [vmem:[%s248 + $0x128] sm:$0xff]
        %v583 = vld [vmem:[%s248 + $0x130] sm:$0xff]
        %v584 = vld [vmem:[%s248 + $0x138] sm:$0xff]
        %v585 = vld [vmem:[%s248 + $0x140] sm:$0xff]
        %v586 = vld [vmem:[%s248 + $0x148] sm:$0xff]
        %v587 = vld [vmem:[%s248 + $0x150] sm:$0xff]
        %v588 = vld [vmem:[%s248 + $0x158] sm:$0xff]
        %v589 = vld [vmem:[%s248 + $0x160] sm:$0xff]
        %v590 = vld [vmem:[%s248 + $0x168] sm:$0xff]
        %v591 = vld [vmem:[%s248 + $0x170] sm:$0xff]
        %v592 = vld [vmem:[%s248 + $0x178] sm:$0xff]
        %v593 = vld [vmem:[%s248 + $0x180] sm:$0xff]
        %v594 = vld [vmem:[%s248 + $0x188] sm:$0xff]
        %v595 = vld [vmem:[%s248 + $0x190] sm:$0xff]
        %v596 = vld [vmem:[%s248 + $0x198] sm:$0xff]
        %v597 = vld [vmem:[%s248 + $0x1a0] sm:$0xff]
        %v598 = vld [vmem:[%s248 + $0x1a8] sm:$0xff]
        %v599 = vld [vmem:[%s248 + $0x1b0] sm:$0xff]
        %v600 = vld [vmem:[%s248 + $0x1b8] sm:$0xff]
        %v601 = vld [vmem:[%s248 + $0x1c0] sm:$0xff]
        %v602 = vld [vmem:[%s248 + $0x1c8] sm:$0xff]
        %v603 = vld [vmem:[%s248 + $0x1d0] sm:$0xff]
        %v604 = vld [vmem:[%s248 + $0x1d8] sm:$0xff]
        %v605 = vld [vmem:[%s248 + $0x1e0] sm:$0xff]
        %v606 = vld [vmem:[%s248 + $0x1e8] sm:$0xff]
        %v607 = vld [vmem:[%s248 + $0x1f0] sm:$0xff]
        %v608 = vld [vmem:[%s248 + $0x1f8] sm:$0xff]
        %v609 = vld [vmem:[%s248 + $0x200] sm:$0xff]
        %v610 = vld [vmem:[%s248 + $0x208] sm:$0xff]
        %v611 = vld [vmem:[%s248 + $0x210] sm:$0xff]
        %v612 = vld [vmem:[%s248 + $0x218] sm:$0xff]
        %v613 = vld [vmem:[%s248 + $0x220] sm:$0xff]
        %v614 = vld [vmem:[%s248 + $0x228] sm:$0xff]
        %v615 = vld [vmem:[%s248 + $0x230] sm:$0xff]
        %v616 = vld [vmem:[%s248 + $0x238] sm:$0xff]
        %v617 = vld [vmem:[%s248 + $0x240] sm:$0xff]
        %v618 = vld [vmem:[%s248 + $0x248] sm:$0xff]
        %v619 = vld [vmem:[%s248 + $0x250] sm:$0xff]
        %v620 = vld [vmem:[%s248 + $0x258] sm:$0xff]
        %v621 = vld [vmem:[%s248 + $0x260] sm:$0xff]
        %v622 = vld [vmem:[%s248 + $0x268] sm:$0xff]
        %v623 = vld [vmem:[%s248 + $0x270] sm:$0xff]
        %v624 = vld [vmem:[%s248 + $0x278] sm:$0xff]
        %v625 = vld [vmem:[%s248 + $0x280] sm:$0xff]
        %v626 = vld [vmem:[%s248 + $0x288] sm:$0xff]
        %v627 = vld [vmem:[%s248 + $0x290] sm:$0xff]
        %v628 = vld [vmem:[%s248 + $0x298] sm:$0xff]
        %v629 = vld [vmem:[%s248 + $0x2a0] sm:$0xff]
        %v630 = vld [vmem:[%s248 + $0x2a8] sm:$0xff]
        %v631 = vld [vmem:[%s248 + $0x2b0] sm:$0xff]
        %v632 = vld [vmem:[%s248 + $0x2b8] sm:$0xff]
        %v633 = vld [vmem:[%s248 + $0x2c0] sm:$0xff]
        %v634 = vld [vmem:[%s248 + $0x2c8] sm:$0xff]
        %v635 = vld [vmem:[%s248 + $0x2d0] sm:$0xff]
        %v636 = vld [vmem:[%s248 + $0x2d8] sm:$0xff]
        %v637 = vld [vmem:[%s248 + $0x2e0] sm:$0xff]
        %v638 = vld [vmem:[%s248 + $0x2e8] sm:$0xff]
        %v639 = vld [vmem:[%s248 + $0x2f0] sm:$0xff]
        %v640 = vld [vmem:[%s248 + $0x2f8] sm:$0xff]
        %v641 = vld [vmem:[%s248 + $0x300] sm:$0xff]
        %v642 = vld [vmem:[%s248 + $0x308] sm:$0xff]
        %v643 = vld [vmem:[%s248 + $0x310] sm:$0xff]
        %v644 = vld [vmem:[%s248 + $0x318] sm:$0xff]
        %v645 = vld [vmem:[%s248 + $0x320] sm:$0xff]
        %v646 = vld [vmem:[%s248 + $0x328] sm:$0xff]
        %v647 = vld [vmem:[%s248 + $0x330] sm:$0xff]
        %v648 = vld [vmem:[%s248 + $0x338] sm:$0xff]
        %v649 = vld [vmem:[%s248 + $0x340] sm:$0xff]
        %v650 = vld [vmem:[%s248 + $0x348] sm:$0xff]
        %v651 = vld [vmem:[%s248 + $0x350] sm:$0xff]
        %v652 = vld [vmem:[%s248 + $0x358] sm:$0xff]
        %v653 = vld [vmem:[%s248 + $0x360] sm:$0xff]
        %v654 = vld [vmem:[%s248 + $0x368] sm:$0xff]
        %v655 = vld [vmem:[%s248 + $0x370] sm:$0xff]
        %v656 = vld [vmem:[%s248 + $0x378] sm:$0xff]
        %v657 = vld [vmem:[%s248 + $0x380] sm:$0xff]
        %v658 = vld [vmem:[%s248 + $0x388] sm:$0xff]
        %v659 = vld [vmem:[%s248 + $0x390] sm:$0xff]
        %v660 = vld [vmem:[%s248 + $0x398] sm:$0xff]
        %v661 = vld [vmem:[%s248 + $0x3a0] sm:$0xff]
        %v662 = vld [vmem:[%s248 + $0x3a8] sm:$0xff]
        %v663 = vld [vmem:[%s248 + $0x3b0] sm:$0xff]
        %v664 = vld [vmem:[%s248 + $0x3b8] sm:$0xff]
        %v665 = vld [vmem:[%s248 + $0x3c0] sm:$0xff]
        %v666 = vld [vmem:[%s248 + $0x3c8] sm:$0xff]
        %v667 = vld [vmem:[%s248 + $0x3d0] sm:$0xff]
        %v668 = vld [vmem:[%s248 + $0x3d8] sm:$0xff]
        %v669 = vld [vmem:[%s248 + $0x3e0] sm:$0xff]
        %v670 = vld [vmem:[%s248 + $0x3e8] sm:$0xff]
        %v671 = vld [vmem:[%s248 + $0x3f0] sm:$0xff]
        %v672 = vld [vmem:[%s248 + $0x3f8] sm:$0xff]
        %v673 = vpack.c.bf16 %v549, %v545
        %v674 = vpack.c.bf16 %v550, %v546
        %v675 = vpack.c.bf16 %v551, %v547
        %v676 = vpack.c.bf16 %v552, %v548
        %v677 = vpack.c.bf16 %v557, %v553
        %v678 = vpack.c.bf16 %v558, %v554
        %v679 = vpack.c.bf16 %v559, %v555
        %v680 = vpack.c.bf16 %v560, %v556
        %v681 = vpack.c.bf16 %v565, %v561
        %v682 = vpack.c.bf16 %v566, %v562
        %v683 = vpack.c.bf16 %v567, %v563
        %v684 = vpack.c.bf16 %v568, %v564
        %v685 = vpack.c.bf16 %v573, %v569
        %v686 = vpack.c.bf16 %v574, %v570
        %v687 = vpack.c.bf16 %v575, %v571
        %v688 = vpack.c.bf16 %v576, %v572
        %v689 = vpack.c.bf16 %v581, %v577
        %v690 = vpack.c.bf16 %v582, %v578
        %v691 = vpack.c.bf16 %v583, %v579
        %v692 = vpack.c.bf16 %v584, %v580
        %v693 = vpack.c.bf16 %v589, %v585
        %v694 = vpack.c.bf16 %v590, %v586
        %v695 = vpack.c.bf16 %v591, %v587
        %v696 = vpack.c.bf16 %v592, %v588
        %v697 = vpack.c.bf16 %v597, %v593
        %v698 = vpack.c.bf16 %v598, %v594
        %v699 = vpack.c.bf16 %v599, %v595
        %v700 = vpack.c.bf16 %v600, %v596
        %v701 = vpack.c.bf16 %v605, %v601
        %v702 = vpack.c.bf16 %v606, %v602
        %v703 = vpack.c.bf16 %v607, %v603
        %v704 = vpack.c.bf16 %v608, %v604
        %v705 = vpack.c.bf16 %v613, %v609
        %v706 = vpack.c.bf16 %v614, %v610
        %v707 = vpack.c.bf16 %v615, %v611
        %v708 = vpack.c.bf16 %v616, %v612
        %v709 = vpack.c.bf16 %v621, %v617
        %v710 = vpack.c.bf16 %v622, %v618
        %v711 = vpack.c.bf16 %v623, %v619
        %v712 = vpack.c.bf16 %v624, %v620
        %v713 = vpack.c.bf16 %v629, %v625
        %v714 = vpack.c.bf16 %v630, %v626
        %v715 = vpack.c.bf16 %v631, %v627
        %v716 = vpack.c.bf16 %v632, %v628
        %v717 = vpack.c.bf16 %v637, %v633
        %v718 = vpack.c.bf16 %v638, %v634
        %v719 = vpack.c.bf16 %v639, %v635
        %v720 = vpack.c.bf16 %v640, %v636
        %v721 = vpack.c.bf16 %v645, %v641
        %v722 = vpack.c.bf16 %v646, %v642
        %v723 = vpack.c.bf16 %v647, %v643
        %v724 = vpack.c.bf16 %v648, %v644
        %v725 = vpack.c.bf16 %v653, %v649
        %v726 = vpack.c.bf16 %v654, %v650
        %v727 = vpack.c.bf16 %v655, %v651
        %v728 = vpack.c.bf16 %v656, %v652
        %v729 = vpack.c.bf16 %v661, %v657
        %v730 = vpack.c.bf16 %v662, %v658
        %v731 = vpack.c.bf16 %v663, %v659
        %v732 = vpack.c.bf16 %v664, %v660
        %v733 = vpack.c.bf16 %v669, %v665
        %v734 = vpack.c.bf16 %v670, %v666
        %v735 = vpack.c.bf16 %v671, %v667
        %v736 = vpack.c.bf16 %v672, %v668
        %s737 = smul.u32 %s29, 512
        %s738 = sshra.s32 %s737, 3
        %s739 = sand.u32 %s737, 7
        %s740 = smul.addr %s738, 4
        %s741 = scalar_lea.vmem %s2, %s740
        %v742 = vld [vmem:[%s741] sm:$0xf]
        %v743 = vld [vmem:[%s741 + $0x4] sm:$0xf]
        %v744 = vld [vmem:[%s741 + $0x8] sm:$0xf]
        %v745 = vld [vmem:[%s741 + $0xc] sm:$0xf]
        %v746 = vld [vmem:[%s741 + $0x10] sm:$0xf]
        %v747 = vld [vmem:[%s741 + $0x14] sm:$0xf]
        %v748 = vld [vmem:[%s741 + $0x18] sm:$0xf]
        %v749 = vld [vmem:[%s741 + $0x1c] sm:$0xf]
        %v750 = vld [vmem:[%s741 + $0x20] sm:$0xf]
        %v751 = vld [vmem:[%s741 + $0x24] sm:$0xf]
        %v752 = vld [vmem:[%s741 + $0x28] sm:$0xf]
        %v753 = vld [vmem:[%s741 + $0x2c] sm:$0xf]
        %v754 = vld [vmem:[%s741 + $0x30] sm:$0xf]
        %v755 = vld [vmem:[%s741 + $0x34] sm:$0xf]
        %v756 = vld [vmem:[%s741 + $0x38] sm:$0xf]
        %v757 = vld [vmem:[%s741 + $0x3c] sm:$0xf]
        %v758 = vld [vmem:[%s741 + $0x40] sm:$0xf]
        %v759 = vld [vmem:[%s741 + $0x44] sm:$0xf]
        %v760 = vld [vmem:[%s741 + $0x48] sm:$0xf]
        %v761 = vld [vmem:[%s741 + $0x4c] sm:$0xf]
        %v762 = vld [vmem:[%s741 + $0x50] sm:$0xf]
        %v763 = vld [vmem:[%s741 + $0x54] sm:$0xf]
        %v764 = vld [vmem:[%s741 + $0x58] sm:$0xf]
        %v765 = vld [vmem:[%s741 + $0x5c] sm:$0xf]
        %v766 = vld [vmem:[%s741 + $0x60] sm:$0xf]
        %v767 = vld [vmem:[%s741 + $0x64] sm:$0xf]
        %v768 = vld [vmem:[%s741 + $0x68] sm:$0xf]
        %v769 = vld [vmem:[%s741 + $0x6c] sm:$0xf]
        %v770 = vld [vmem:[%s741 + $0x70] sm:$0xf]
        %v771 = vld [vmem:[%s741 + $0x74] sm:$0xf]
        %v772 = vld [vmem:[%s741 + $0x78] sm:$0xf]
        %v773 = vld [vmem:[%s741 + $0x7c] sm:$0xf]
        %v774 = vld [vmem:[%s741 + $0x80] sm:$0xf]
        %v775 = vld [vmem:[%s741 + $0x84] sm:$0xf]
        %v776 = vld [vmem:[%s741 + $0x88] sm:$0xf]
        %v777 = vld [vmem:[%s741 + $0x8c] sm:$0xf]
        %v778 = vld [vmem:[%s741 + $0x90] sm:$0xf]
        %v779 = vld [vmem:[%s741 + $0x94] sm:$0xf]
        %v780 = vld [vmem:[%s741 + $0x98] sm:$0xf]
        %v781 = vld [vmem:[%s741 + $0x9c] sm:$0xf]
        %v782 = vld [vmem:[%s741 + $0xa0] sm:$0xf]
        %v783 = vld [vmem:[%s741 + $0xa4] sm:$0xf]
        %v784 = vld [vmem:[%s741 + $0xa8] sm:$0xf]
        %v785 = vld [vmem:[%s741 + $0xac] sm:$0xf]
        %v786 = vld [vmem:[%s741 + $0xb0] sm:$0xf]
        %v787 = vld [vmem:[%s741 + $0xb4] sm:$0xf]
        %v788 = vld [vmem:[%s741 + $0xb8] sm:$0xf]
        %v789 = vld [vmem:[%s741 + $0xbc] sm:$0xf]
        %v790 = vld [vmem:[%s741 + $0xc0] sm:$0xf]
        %v791 = vld [vmem:[%s741 + $0xc4] sm:$0xf]
        %v792 = vld [vmem:[%s741 + $0xc8] sm:$0xf]
        %v793 = vld [vmem:[%s741 + $0xcc] sm:$0xf]
        %v794 = vld [vmem:[%s741 + $0xd0] sm:$0xf]
        %v795 = vld [vmem:[%s741 + $0xd4] sm:$0xf]
        %v796 = vld [vmem:[%s741 + $0xd8] sm:$0xf]
        %v797 = vld [vmem:[%s741 + $0xdc] sm:$0xf]
        %v798 = vld [vmem:[%s741 + $0xe0] sm:$0xf]
        %v799 = vld [vmem:[%s741 + $0xe4] sm:$0xf]
        %v800 = vld [vmem:[%s741 + $0xe8] sm:$0xf]
        %v801 = vld [vmem:[%s741 + $0xec] sm:$0xf]
        %v802 = vld [vmem:[%s741 + $0xf0] sm:$0xf]
        %v803 = vld [vmem:[%s741 + $0xf4] sm:$0xf]
        %v804 = vld [vmem:[%s741 + $0xf8] sm:$0xf]
        %v805 = vld [vmem:[%s741 + $0xfc] sm:$0xf]
        %s806 = smul.addr %s738, 4
        %s807 = scalar_lea.vmem %s3, %s806
        %v808 = vld [vmem:[%s807] sm:$0xf]
        %v809 = vld [vmem:[%s807 + $0x4] sm:$0xf]
        %v810 = vld [vmem:[%s807 + $0x8] sm:$0xf]
        %v811 = vld [vmem:[%s807 + $0xc] sm:$0xf]
        %v812 = vld [vmem:[%s807 + $0x10] sm:$0xf]
        %v813 = vld [vmem:[%s807 + $0x14] sm:$0xf]
        %v814 = vld [vmem:[%s807 + $0x18] sm:$0xf]
        %v815 = vld [vmem:[%s807 + $0x1c] sm:$0xf]
        %v816 = vld [vmem:[%s807 + $0x20] sm:$0xf]
        %v817 = vld [vmem:[%s807 + $0x24] sm:$0xf]
        %v818 = vld [vmem:[%s807 + $0x28] sm:$0xf]
        %v819 = vld [vmem:[%s807 + $0x2c] sm:$0xf]
        %v820 = vld [vmem:[%s807 + $0x30] sm:$0xf]
        %v821 = vld [vmem:[%s807 + $0x34] sm:$0xf]
        %v822 = vld [vmem:[%s807 + $0x38] sm:$0xf]
        %v823 = vld [vmem:[%s807 + $0x3c] sm:$0xf]
        %v824 = vld [vmem:[%s807 + $0x40] sm:$0xf]
        %v825 = vld [vmem:[%s807 + $0x44] sm:$0xf]
        %v826 = vld [vmem:[%s807 + $0x48] sm:$0xf]
        %v827 = vld [vmem:[%s807 + $0x4c] sm:$0xf]
        %v828 = vld [vmem:[%s807 + $0x50] sm:$0xf]
        %v829 = vld [vmem:[%s807 + $0x54] sm:$0xf]
        %v830 = vld [vmem:[%s807 + $0x58] sm:$0xf]
        %v831 = vld [vmem:[%s807 + $0x5c] sm:$0xf]
        %v832 = vld [vmem:[%s807 + $0x60] sm:$0xf]
        %v833 = vld [vmem:[%s807 + $0x64] sm:$0xf]
        %v834 = vld [vmem:[%s807 + $0x68] sm:$0xf]
        %v835 = vld [vmem:[%s807 + $0x6c] sm:$0xf]
        %v836 = vld [vmem:[%s807 + $0x70] sm:$0xf]
        %v837 = vld [vmem:[%s807 + $0x74] sm:$0xf]
        %v838 = vld [vmem:[%s807 + $0x78] sm:$0xf]
        %v839 = vld [vmem:[%s807 + $0x7c] sm:$0xf]
        %v840 = vld [vmem:[%s807 + $0x80] sm:$0xf]
        %v841 = vld [vmem:[%s807 + $0x84] sm:$0xf]
        %v842 = vld [vmem:[%s807 + $0x88] sm:$0xf]
        %v843 = vld [vmem:[%s807 + $0x8c] sm:$0xf]
        %v844 = vld [vmem:[%s807 + $0x90] sm:$0xf]
        %v845 = vld [vmem:[%s807 + $0x94] sm:$0xf]
        %v846 = vld [vmem:[%s807 + $0x98] sm:$0xf]
        %v847 = vld [vmem:[%s807 + $0x9c] sm:$0xf]
        %v848 = vld [vmem:[%s807 + $0xa0] sm:$0xf]
        %v849 = vld [vmem:[%s807 + $0xa4] sm:$0xf]
        %v850 = vld [vmem:[%s807 + $0xa8] sm:$0xf]
        %v851 = vld [vmem:[%s807 + $0xac] sm:$0xf]
        %v852 = vld [vmem:[%s807 + $0xb0] sm:$0xf]
        %v853 = vld [vmem:[%s807 + $0xb4] sm:$0xf]
        %v854 = vld [vmem:[%s807 + $0xb8] sm:$0xf]
        %v855 = vld [vmem:[%s807 + $0xbc] sm:$0xf]
        %v856 = vld [vmem:[%s807 + $0xc0] sm:$0xf]
        %v857 = vld [vmem:[%s807 + $0xc4] sm:$0xf]
        %v858 = vld [vmem:[%s807 + $0xc8] sm:$0xf]
        %v859 = vld [vmem:[%s807 + $0xcc] sm:$0xf]
        %v860 = vld [vmem:[%s807 + $0xd0] sm:$0xf]
        %v861 = vld [vmem:[%s807 + $0xd4] sm:$0xf]
        %v862 = vld [vmem:[%s807 + $0xd8] sm:$0xf]
        %v863 = vld [vmem:[%s807 + $0xdc] sm:$0xf]
        %v864 = vld [vmem:[%s807 + $0xe0] sm:$0xf]
        %v865 = vld [vmem:[%s807 + $0xe4] sm:$0xf]
        %v866 = vld [vmem:[%s807 + $0xe8] sm:$0xf]
        %v867 = vld [vmem:[%s807 + $0xec] sm:$0xf]
        %v868 = vld [vmem:[%s807 + $0xf0] sm:$0xf]
        %v869 = vld [vmem:[%s807 + $0xf4] sm:$0xf]
        %v870 = vld [vmem:[%s807 + $0xf8] sm:$0xf]
        %v871 = vld [vmem:[%s807 + $0xfc] sm:$0xf]
        %v872 = vld [vmem:[#allocation2] sm:$0xff]
        %v873 = vld [vmem:[#allocation2 + $0x8] sm:$0xff]
        %v874 = vld [vmem:[#allocation2 + $0x10] sm:$0xff]
        %v875 = vld [vmem:[#allocation2 + $0x18] sm:$0xff]
        %v876 = vld [vmem:[#allocation2 + $0x20] sm:$0xff]
        %v877 = vld [vmem:[#allocation2 + $0x28] sm:$0xff]
        %v878 = vld [vmem:[#allocation2 + $0x30] sm:$0xff]
        %v879 = vld [vmem:[#allocation2 + $0x38] sm:$0xff]
        %v880 = vld [vmem:[#allocation2 + $0x40] sm:$0xff]
        %v881 = vld [vmem:[#allocation2 + $0x48] sm:$0xff]
        %v882 = vld [vmem:[#allocation2 + $0x50] sm:$0xff]
        %v883 = vld [vmem:[#allocation2 + $0x58] sm:$0xff]
        %v884 = vld [vmem:[#allocation2 + $0x60] sm:$0xff]
        %v885 = vld [vmem:[#allocation2 + $0x68] sm:$0xff]
        %v886 = vld [vmem:[#allocation2 + $0x70] sm:$0xff]
        %v887 = vld [vmem:[#allocation2 + $0x78] sm:$0xff]
        %v888 = vld [vmem:[#allocation2 + $0x80] sm:$0xff]
        %v889 = vld [vmem:[#allocation2 + $0x88] sm:$0xff]
        %v890 = vld [vmem:[#allocation2 + $0x90] sm:$0xff]
        %v891 = vld [vmem:[#allocation2 + $0x98] sm:$0xff]
        %v892 = vld [vmem:[#allocation2 + $0xa0] sm:$0xff]
        %v893 = vld [vmem:[#allocation2 + $0xa8] sm:$0xff]
        %v894 = vld [vmem:[#allocation2 + $0xb0] sm:$0xff]
        %v895 = vld [vmem:[#allocation2 + $0xb8] sm:$0xff]
        %v896 = vld [vmem:[#allocation2 + $0xc0] sm:$0xff]
        %v897 = vld [vmem:[#allocation2 + $0xc8] sm:$0xff]
        %v898 = vld [vmem:[#allocation2 + $0xd0] sm:$0xff]
        %v899 = vld [vmem:[#allocation2 + $0xd8] sm:$0xff]
        %v900 = vld [vmem:[#allocation2 + $0xe0] sm:$0xff]
        %v901 = vld [vmem:[#allocation2 + $0xe8] sm:$0xff]
        %v902 = vld [vmem:[#allocation2 + $0xf0] sm:$0xff]
        %v903 = vld [vmem:[#allocation2 + $0xf8] sm:$0xff]
        %v968 = vunpack.c.l.b16 %v742
        %v969 = vunpack.c.l.b16 %v743
        %v970 = vunpack.c.l.b16 %v744
        %v971 = vunpack.c.l.b16 %v745
        %v972 = vunpack.c.l.b16 %v746
        %v973 = vunpack.c.l.b16 %v747
        %v974 = vunpack.c.l.b16 %v748
        %v975 = vunpack.c.l.b16 %v749
        %v976 = vunpack.c.l.b16 %v750
        %v977 = vunpack.c.l.b16 %v751
        %v978 = vunpack.c.l.b16 %v752
        %v979 = vunpack.c.l.b16 %v753
        %v980 = vunpack.c.l.b16 %v754
        %v981 = vunpack.c.l.b16 %v755
        %v982 = vunpack.c.l.b16 %v756
        %v983 = vunpack.c.l.b16 %v757
        %v984 = vunpack.c.l.b16 %v758
        %v985 = vunpack.c.l.b16 %v759
        %v986 = vunpack.c.l.b16 %v760
        %v987 = vunpack.c.l.b16 %v761
        %v988 = vunpack.c.l.b16 %v762
        %v989 = vunpack.c.l.b16 %v763
        %v990 = vunpack.c.l.b16 %v764
        %v991 = vunpack.c.l.b16 %v765
        %v992 = vunpack.c.l.b16 %v766
        %v993 = vunpack.c.l.b16 %v767
        %v994 = vunpack.c.l.b16 %v768
        %v995 = vunpack.c.l.b16 %v769
        %v996 = vunpack.c.l.b16 %v770
        %v997 = vunpack.c.l.b16 %v771
        %v998 = vunpack.c.l.b16 %v772
        %v999 = vunpack.c.l.b16 %v773
        %v1000 = vunpack.c.l.b16 %v774
        %v1001 = vunpack.c.l.b16 %v775
        %v1002 = vunpack.c.l.b16 %v776
        %v1003 = vunpack.c.l.b16 %v777
        %v1004 = vunpack.c.l.b16 %v778
        %v1005 = vunpack.c.l.b16 %v779
        %v1006 = vunpack.c.l.b16 %v780
        %v1007 = vunpack.c.l.b16 %v781
        %v1008 = vunpack.c.l.b16 %v782
        %v1009 = vunpack.c.l.b16 %v783
        %v1010 = vunpack.c.l.b16 %v784
        %v1011 = vunpack.c.l.b16 %v785
        %v1012 = vunpack.c.l.b16 %v786
        %v1013 = vunpack.c.l.b16 %v787
        %v1014 = vunpack.c.l.b16 %v788
        %v1015 = vunpack.c.l.b16 %v789
        %v1016 = vunpack.c.l.b16 %v790
        %v1017 = vunpack.c.l.b16 %v791
        %v1018 = vunpack.c.l.b16 %v792
        %v1019 = vunpack.c.l.b16 %v793
        %v1020 = vunpack.c.l.b16 %v794
        %v1021 = vunpack.c.l.b16 %v795
        %v1022 = vunpack.c.l.b16 %v796
        %v1023 = vunpack.c.l.b16 %v797
        %v1024 = vunpack.c.l.b16 %v798
        %v1025 = vunpack.c.l.b16 %v799
        %v1026 = vunpack.c.l.b16 %v800
        %v1027 = vunpack.c.l.b16 %v801
        %v1028 = vunpack.c.l.b16 %v802
        %v1029 = vunpack.c.l.b16 %v803
        %v1030 = vunpack.c.l.b16 %v804
        %v1031 = vunpack.c.l.b16 %v805
        %v1032 = vpack.c.b16 %v969, %v968
        %v1033 = vpack.c.b16 %v971, %v970
        %v1034 = vpack.c.b16 %v973, %v972
        %v1035 = vpack.c.b16 %v975, %v974
        %v1036 = vpack.c.b16 %v977, %v976
        %v1037 = vpack.c.b16 %v979, %v978
        %v1038 = vpack.c.b16 %v981, %v980
        %v1039 = vpack.c.b16 %v983, %v982
        %v1040 = vpack.c.b16 %v985, %v984
        %v1041 = vpack.c.b16 %v987, %v986
        %v1042 = vpack.c.b16 %v989, %v988
        %v1043 = vpack.c.b16 %v991, %v990
        %v1044 = vpack.c.b16 %v993, %v992
        %v1045 = vpack.c.b16 %v995, %v994
        %v1046 = vpack.c.b16 %v997, %v996
        %v1047 = vpack.c.b16 %v999, %v998
        %v1048 = vpack.c.b16 %v1001, %v1000
        %v1049 = vpack.c.b16 %v1003, %v1002
        %v1050 = vpack.c.b16 %v1005, %v1004
        %v1051 = vpack.c.b16 %v1007, %v1006
        %v1052 = vpack.c.b16 %v1009, %v1008
        %v1053 = vpack.c.b16 %v1011, %v1010
        %v1054 = vpack.c.b16 %v1013, %v1012
        %v1055 = vpack.c.b16 %v1015, %v1014
        %v1056 = vpack.c.b16 %v1017, %v1016
        %v1057 = vpack.c.b16 %v1019, %v1018
        %v1058 = vpack.c.b16 %v1021, %v1020
        %v1059 = vpack.c.b16 %v1023, %v1022
        %v1060 = vpack.c.b16 %v1025, %v1024
        %v1061 = vpack.c.b16 %v1027, %v1026
        %v1062 = vpack.c.b16 %v1029, %v1028
        %v1063 = vpack.c.b16 %v1031, %v1030
        %1096 = vmatprep.subr.bf16.mxu0 0
        %1097 = vmatpush1.bf16.msra.mxu0 %v1032
        %1098 = vmatprep.subr.bf16.mxu0 0
        %1099 = vmatpush1.bf16.msra.mxu0 %v1033
        %1100 = vmatprep.subr.bf16.mxu0 0
        %1101 = vmatpush1.bf16.msra.mxu0 %v1034
        %1102 = vmatprep.subr.bf16.mxu0 0
        %1103 = vmatpush1.bf16.msra.mxu0 %v1035
        %1104 = vmatprep.subr.bf16.mxu0 0
        %1105 = vmatpush1.bf16.msra.mxu0 %v1036
        %1106 = vmatprep.subr.bf16.mxu0 0
        %1107 = vmatpush1.bf16.msra.mxu0 %v1037
        %1108 = vmatprep.subr.bf16.mxu0 0
        %1109 = vmatpush1.bf16.msra.mxu0 %v1038
        %1110 = vmatprep.subr.bf16.mxu0 0
        %1111 = vmatpush1.bf16.msra.mxu0 %v1039
        %1112 = vmatprep.subr.bf16.mxu0 0
        %1113 = vmatpush1.bf16.msra.mxu0 %v1040
        %1114 = vmatprep.subr.bf16.mxu0 0
        %1115 = vmatpush1.bf16.msra.mxu0 %v1041
        %1116 = vmatprep.subr.bf16.mxu0 0
        %1117 = vmatpush1.bf16.msra.mxu0 %v1042
        %1118 = vmatprep.subr.bf16.mxu0 0
        %1119 = vmatpush1.bf16.msra.mxu0 %v1043
        %1120 = vmatprep.subr.bf16.mxu0 0
        %1121 = vmatpush1.bf16.msra.mxu0 %v1044
        %1122 = vmatprep.subr.bf16.mxu0 0
        %1123 = vmatpush1.bf16.msra.mxu0 %v1045
        %1124 = vmatprep.subr.bf16.mxu0 0
        %1125 = vmatpush1.bf16.msra.mxu0 %v1046
        %1126 = vmatprep.subr.bf16.mxu0 0
        %1127 = vmatpush1.bf16.msra.mxu0 %v1047
        %1128 = vmatprep.mubr.bf16.mxu0 %v482
        %1129 = vmatmul.mubr.bf16.gmra.mrb[0].mxu0 %v481
        %v1130 = vpop.f32.mrb[0].mxu0
        %v1131 = vadd.f32 0.0, %v1130
        %v1132 = vpop.f32.mrb[0].mxu0
        %v1133 = vpop.f32.mrb[0].mxu0
        %v1134 = vadd.f32 0.0, %v1133
        %v1135 = vpop.f32.mrb[0].mxu0
        %1136 = vmatprep.mubr.bf16.mxu0 %v486
        %1137 = vmatmul.mubr.bf16.gmra.mrb[0].mxu0 %v485
        %v1138 = vpop.f32.mrb[0].mxu0
        %v1139 = vadd.f32 0.0, %v1138
        %v1140 = vpop.f32.mrb[0].mxu0
        %v1141 = vpop.f32.mrb[0].mxu0
        %v1142 = vadd.f32 0.0, %v1141
        %v1143 = vpop.f32.mrb[0].mxu0
        %1144 = vmatprep.mubr.bf16.mxu0 %v490
        %1145 = vmatmul.mubr.bf16.gmra.mrb[0].mxu0 %v489
        %v1146 = vpop.f32.mrb[0].mxu0
        %v1147 = vadd.f32 0.0, %v1146
        %v1148 = vpop.f32.mrb[0].mxu0
        %v1149 = vpop.f32.mrb[0].mxu0
        %v1150 = vadd.f32 0.0, %v1149
        %v1151 = vpop.f32.mrb[0].mxu0
        %1152 = vmatprep.mubr.bf16.mxu0 %v494
        %1153 = vmatmul.mubr.bf16.gmra.mrb[0].mxu0 %v493
        %v1154 = vpop.f32.mrb[0].mxu0
        %v1155 = vadd.f32 0.0, %v1154
        %v1156 = vpop.f32.mrb[0].mxu0
        %v1157 = vpop.f32.mrb[0].mxu0
        %v1158 = vadd.f32 0.0, %v1157
        %v1159 = vpop.f32.mrb[0].mxu0
        %1160 = vmatprep.mubr.bf16.mxu0 %v498
        %1161 = vmatmul.mubr.bf16.gmra.mrb[0].mxu0 %v497
        %v1162 = vpop.f32.mrb[0].mxu0
        %v1163 = vadd.f32 0.0, %v1162
        %v1164 = vpop.f32.mrb[0].mxu0
        %v1165 = vpop.f32.mrb[0].mxu0
        %v1166 = vadd.f32 0.0, %v1165
        %v1167 = vpop.f32.mrb[0].mxu0
        %1168 = vmatprep.mubr.bf16.mxu0 %v502
        %1169 = vmatmul.mubr.bf16.gmra.mrb[0].mxu0 %v501
        %v1170 = vpop.f32.mrb[0].mxu0
        %v1171 = vadd.f32 0.0, %v1170
        %v1172 = vpop.f32.mrb[0].mxu0
        %v1173 = vpop.f32.mrb[0].mxu0
        %v1174 = vadd.f32 0.0, %v1173
        %v1175 = vpop.f32.mrb[0].mxu0
        %1176 = vmatprep.mubr.bf16.mxu0 %v506
        %1177 = vmatmul.mubr.bf16.gmra.mrb[0].mxu0 %v505
        %v1178 = vpop.f32.mrb[0].mxu0
        %v1179 = vadd.f32 0.0, %v1178
        %v1180 = vpop.f32.mrb[0].mxu0
        %v1181 = vpop.f32.mrb[0].mxu0
        %v1182 = vadd.f32 0.0, %v1181
        %v1183 = vpop.f32.mrb[0].mxu0
        %1184 = vmatprep.mubr.bf16.mxu0 %v510
        %1185 = vmatmul.mubr.bf16.gmra.mrb[0].mxu0 %v509
        %v1186 = vpop.f32.mrb[0].mxu0
        %v1187 = vadd.f32 0.0, %v1186
        %v1188 = vpop.f32.mrb[0].mxu0
        %v1189 = vpop.f32.mrb[0].mxu0
        %v1190 = vadd.f32 0.0, %v1189
        %v1191 = vpop.f32.mrb[0].mxu0
        %1192 = vmatprep.mubr.bf16.mxu0 %v514
        %1193 = vmatmul.mubr.bf16.gmra.mrb[0].mxu0 %v513
        %v1194 = vpop.f32.mrb[0].mxu0
        %v1195 = vadd.f32 0.0, %v1194
        %v1196 = vpop.f32.mrb[0].mxu0
        %v1197 = vpop.f32.mrb[0].mxu0
        %v1198 = vadd.f32 0.0, %v1197
        %v1199 = vpop.f32.mrb[0].mxu0
        %1200 = vmatprep.mubr.bf16.mxu0 %v518
        %1201 = vmatmul.mubr.bf16.gmra.mrb[0].mxu0 %v517
        %v1202 = vpop.f32.mrb[0].mxu0
        %v1203 = vadd.f32 0.0, %v1202
        %v1204 = vpop.f32.mrb[0].mxu0
        %v1205 = vpop.f32.mrb[0].mxu0
        %v1206 = vadd.f32 0.0, %v1205
        %v1207 = vpop.f32.mrb[0].mxu0
        %1208 = vmatprep.mubr.bf16.mxu0 %v522
        %1209 = vmatmul.mubr.bf16.gmra.mrb[0].mxu0 %v521
        %v1210 = vpop.f32.mrb[0].mxu0
        %v1211 = vadd.f32 0.0, %v1210
        %v1212 = vpop.f32.mrb[0].mxu0
        %v1213 = vpop.f32.mrb[0].mxu0
        %v1214 = vadd.f32 0.0, %v1213
        %v1215 = vpop.f32.mrb[0].mxu0
        %1216 = vmatprep.mubr.bf16.mxu0 %v526
        %1217 = vmatmul.mubr.bf16.gmra.mrb[0].mxu0 %v525
        %v1218 = vpop.f32.mrb[0].mxu0
        %v1219 = vadd.f32 0.0, %v1218
        %v1220 = vpop.f32.mrb[0].mxu0
        %v1221 = vpop.f32.mrb[0].mxu0
        %v1222 = vadd.f32 0.0, %v1221
        %v1223 = vpop.f32.mrb[0].mxu0
        %1224 = vmatprep.mubr.bf16.mxu0 %v530
        %1225 = vmatmul.mubr.bf16.gmra.mrb[0].mxu0 %v529
        %v1226 = vpop.f32.mrb[0].mxu0
        %v1227 = vadd.f32 0.0, %v1226
        %v1228 = vpop.f32.mrb[0].mxu0
        %v1229 = vpop.f32.mrb[0].mxu0
        %v1230 = vadd.f32 0.0, %v1229
        %v1231 = vpop.f32.mrb[0].mxu0
        %1232 = vmatprep.mubr.bf16.mxu0 %v534
        %1233 = vmatmul.mubr.bf16.gmra.mrb[0].mxu0 %v533
        %v1234 = vpop.f32.mrb[0].mxu0
        %v1235 = vadd.f32 0.0, %v1234
        %v1236 = vpop.f32.mrb[0].mxu0
        %v1237 = vpop.f32.mrb[0].mxu0
        %v1238 = vadd.f32 0.0, %v1237
        %v1239 = vpop.f32.mrb[0].mxu0
        %1240 = vmatprep.mubr.bf16.mxu0 %v538
        %1241 = vmatmul.mubr.bf16.gmra.mrb[0].mxu0 %v537
        %v1242 = vpop.f32.mrb[0].mxu0
        %v1243 = vadd.f32 0.0, %v1242
        %v1244 = vpop.f32.mrb[0].mxu0
        %v1245 = vpop.f32.mrb[0].mxu0
        %v1246 = vadd.f32 0.0, %v1245
        %v1247 = vpop.f32.mrb[0].mxu0
        %1248 = vmatprep.mubr.bf16.mxu0 %v542
        %1249 = vmatmul.mubr.bf16.gmra.mrb[0].mxu0 %v541
        %v1250 = vpop.f32.mrb[0].mxu0
        %v1251 = vadd.f32 0.0, %v1250
        %v1252 = vpop.f32.mrb[0].mxu0
        %v1253 = vpop.f32.mrb[0].mxu0
        %v1254 = vadd.f32 0.0, %v1253
        %v1255 = vpop.f32.mrb[0].mxu0
        %1256 = vdwg.mxu0
        %1257 = vmatprep.subr.bf16.mxu0 0
        %1258 = vmatpush1.bf16.msra.mxu0 %v1048
        %1259 = vmatprep.subr.bf16.mxu0 0
        %1260 = vmatpush1.bf16.msra.mxu0 %v1049
        %1261 = vmatprep.subr.bf16.mxu0 0
        %1262 = vmatpush1.bf16.msra.mxu0 %v1050
        %1263 = vmatprep.subr.bf16.mxu0 0
        %1264 = vmatpush1.bf16.msra.mxu0 %v1051
        %1265 = vmatprep.subr.bf16.mxu0 0
        %1266 = vmatpush1.bf16.msra.mxu0 %v1052
        %1267 = vmatprep.subr.bf16.mxu0 0
        %1268 = vmatpush1.bf16.msra.mxu0 %v1053
        %1269 = vmatprep.subr.bf16.mxu0 0
        %1270 = vmatpush1.bf16.msra.mxu0 %v1054
        %1271 = vmatprep.subr.bf16.mxu0 0
        %1272 = vmatpush1.bf16.msra.mxu0 %v1055
        %1273 = vmatprep.subr.bf16.mxu0 0
        %1274 = vmatpush1.bf16.msra.mxu0 %v1056
        %1275 = vmatprep.subr.bf16.mxu0 0
        %1276 = vmatpush1.bf16.msra.mxu0 %v1057
        %1277 = vmatprep.subr.bf16.mxu0 0
        %1278 = vmatpush1.bf16.msra.mxu0 %v1058
        %1279 = vmatprep.subr.bf16.mxu0 0
        %1280 = vmatpush1.bf16.msra.mxu0 %v1059
        %1281 = vmatprep.subr.bf16.mxu0 0
        %1282 = vmatpush1.bf16.msra.mxu0 %v1060
        %1283 = vmatprep.subr.bf16.mxu0 0
        %1284 = vmatpush1.bf16.msra.mxu0 %v1061
        %1285 = vmatprep.subr.bf16.mxu0 0
        %1286 = vmatpush1.bf16.msra.mxu0 %v1062
        %1287 = vmatprep.subr.bf16.mxu0 0
        %1288 = vmatpush1.bf16.msra.mxu0 %v1063
        %1289 = vmatprep.mubr.bf16.mxu0 %v484
        %1290 = vmatmul.mubr.bf16.gmra.mrb[0].mxu0 %v483
        %v1291 = vpop.f32.mrb[0].mxu0
        %v1292 = vadd.f32 %v1131, %v1291
        %v1293 = vpop.f32.mrb[0].mxu0
        %v1294 = vpop.f32.mrb[0].mxu0
        %v1295 = vadd.f32 %v1134, %v1294
        %v1296 = vpop.f32.mrb[0].mxu0
        %1297 = vmatprep.mubr.bf16.mxu0 %v488
        %1298 = vmatmul.mubr.bf16.gmra.mrb[0].mxu0 %v487
        %v1299 = vpop.f32.mrb[0].mxu0
        %v1300 = vadd.f32 %v1139, %v1299
        %v1301 = vpop.f32.mrb[0].mxu0
        %v1302 = vpop.f32.mrb[0].mxu0
        %v1303 = vadd.f32 %v1142, %v1302
        %v1304 = vpop.f32.mrb[0].mxu0
        %1305 = vmatprep.mubr.bf16.mxu0 %v492
        %1306 = vmatmul.mubr.bf16.gmra.mrb[0].mxu0 %v491
        %v1307 = vpop.f32.mrb[0].mxu0
        %v1308 = vadd.f32 %v1147, %v1307
        %v1309 = vpop.f32.mrb[0].mxu0
        %v1310 = vpop.f32.mrb[0].mxu0
        %v1311 = vadd.f32 %v1150, %v1310
        %v1312 = vpop.f32.mrb[0].mxu0
        %1313 = vmatprep.mubr.bf16.mxu0 %v496
        %1314 = vmatmul.mubr.bf16.gmra.mrb[0].mxu0 %v495
        %v1315 = vpop.f32.mrb[0].mxu0
        %v1316 = vadd.f32 %v1155, %v1315
        %v1317 = vpop.f32.mrb[0].mxu0
        %v1318 = vpop.f32.mrb[0].mxu0
        %v1319 = vadd.f32 %v1158, %v1318
        %v1320 = vpop.f32.mrb[0].mxu0
        %1321 = vmatprep.mubr.bf16.mxu0 %v500
        %1322 = vmatmul.mubr.bf16.gmra.mrb[0].mxu0 %v499
        %v1323 = vpop.f32.mrb[0].mxu0
        %v1324 = vadd.f32 %v1163, %v1323
        %v1325 = vpop.f32.mrb[0].mxu0
        %v1326 = vpop.f32.mrb[0].mxu0
        %v1327 = vadd.f32 %v1166, %v1326
        %v1328 = vpop.f32.mrb[0].mxu0
        %1329 = vmatprep.mubr.bf16.mxu0 %v504
        %1330 = vmatmul.mubr.bf16.gmra.mrb[0].mxu0 %v503
        %v1331 = vpop.f32.mrb[0].mxu0
        %v1332 = vadd.f32 %v1171, %v1331
        %v1333 = vpop.f32.mrb[0].mxu0
        %v1334 = vpop.f32.mrb[0].mxu0
        %v1335 = vadd.f32 %v1174, %v1334
        %v1336 = vpop.f32.mrb[0].mxu0
        %1337 = vmatprep.mubr.bf16.mxu0 %v508
        %1338 = vmatmul.mubr.bf16.gmra.mrb[0].mxu0 %v507
        %v1339 = vpop.f32.mrb[0].mxu0
        %v1340 = vadd.f32 %v1179, %v1339
        %v1341 = vpop.f32.mrb[0].mxu0
        %v1342 = vpop.f32.mrb[0].mxu0
        %v1343 = vadd.f32 %v1182, %v1342
        %v1344 = vpop.f32.mrb[0].mxu0
        %1345 = vmatprep.mubr.bf16.mxu0 %v512
        %1346 = vmatmul.mubr.bf16.gmra.mrb[0].mxu0 %v511
        %v1347 = vpop.f32.mrb[0].mxu0
        %v1348 = vadd.f32 %v1187, %v1347
        %v1349 = vpop.f32.mrb[0].mxu0
        %v1350 = vpop.f32.mrb[0].mxu0
        %v1351 = vadd.f32 %v1190, %v1350
        %v1352 = vpop.f32.mrb[0].mxu0
        %1353 = vmatprep.mubr.bf16.mxu0 %v516
        %1354 = vmatmul.mubr.bf16.gmra.mrb[0].mxu0 %v515
        %v1355 = vpop.f32.mrb[0].mxu0
        %v1356 = vadd.f32 %v1195, %v1355
        %v1357 = vpop.f32.mrb[0].mxu0
        %v1358 = vpop.f32.mrb[0].mxu0
        %v1359 = vadd.f32 %v1198, %v1358
        %v1360 = vpop.f32.mrb[0].mxu0
        %1361 = vmatprep.mubr.bf16.mxu0 %v520
        %1362 = vmatmul.mubr.bf16.gmra.mrb[0].mxu0 %v519
        %v1363 = vpop.f32.mrb[0].mxu0
        %v1364 = vadd.f32 %v1203, %v1363
        %v1365 = vpop.f32.mrb[0].mxu0
        %v1366 = vpop.f32.mrb[0].mxu0
        %v1367 = vadd.f32 %v1206, %v1366
        %v1368 = vpop.f32.mrb[0].mxu0
        %1369 = vmatprep.mubr.bf16.mxu0 %v524
        %1370 = vmatmul.mubr.bf16.gmra.mrb[0].mxu0 %v523
        %v1371 = vpop.f32.mrb[0].mxu0
        %v1372 = vadd.f32 %v1211, %v1371
        %v1373 = vpop.f32.mrb[0].mxu0
        %v1374 = vpop.f32.mrb[0].mxu0
        %v1375 = vadd.f32 %v1214, %v1374
        %v1376 = vpop.f32.mrb[0].mxu0
        %1377 = vmatprep.mubr.bf16.mxu0 %v528
        %1378 = vmatmul.mubr.bf16.gmra.mrb[0].mxu0 %v527
        %v1379 = vpop.f32.mrb[0].mxu0
        %v1380 = vadd.f32 %v1219, %v1379
        %v1381 = vpop.f32.mrb[0].mxu0
        %v1382 = vpop.f32.mrb[0].mxu0
        %v1383 = vadd.f32 %v1222, %v1382
        %v1384 = vpop.f32.mrb[0].mxu0
        %1385 = vmatprep.mubr.bf16.mxu0 %v532
        %1386 = vmatmul.mubr.bf16.gmra.mrb[0].mxu0 %v531
        %v1387 = vpop.f32.mrb[0].mxu0
        %v1388 = vadd.f32 %v1227, %v1387
        %v1389 = vpop.f32.mrb[0].mxu0
        %v1390 = vpop.f32.mrb[0].mxu0
        %v1391 = vadd.f32 %v1230, %v1390
        %v1392 = vpop.f32.mrb[0].mxu0
        %1393 = vmatprep.mubr.bf16.mxu0 %v536
        %1394 = vmatmul.mubr.bf16.gmra.mrb[0].mxu0 %v535
        %v1395 = vpop.f32.mrb[0].mxu0
        %v1396 = vadd.f32 %v1235, %v1395
        %v1397 = vpop.f32.mrb[0].mxu0
        %v1398 = vpop.f32.mrb[0].mxu0
        %v1399 = vadd.f32 %v1238, %v1398
        %v1400 = vpop.f32.mrb[0].mxu0
        %1401 = vmatprep.mubr.bf16.mxu0 %v540
        %1402 = vmatmul.mubr.bf16.gmra.mrb[0].mxu0 %v539
        %v1403 = vpop.f32.mrb[0].mxu0
        %v1404 = vadd.f32 %v1243, %v1403
        %v1405 = vpop.f32.mrb[0].mxu0
        %v1406 = vpop.f32.mrb[0].mxu0
        %v1407 = vadd.f32 %v1246, %v1406
        %v1408 = vpop.f32.mrb[0].mxu0
        %1409 = vmatprep.mubr.bf16.mxu0 %v544
        %1410 = vmatmul.mubr.bf16.gmra.mrb[0].mxu0 %v543
        %v1411 = vpop.f32.mrb[0].mxu0
        %v1412 = vadd.f32 %v1251, %v1411
        %v1413 = vpop.f32.mrb[0].mxu0
        %v1414 = vpop.f32.mrb[0].mxu0
        %v1415 = vadd.f32 %v1254, %v1414
        %v1416 = vpop.f32.mrb[0].mxu0
        %1417 = vdwg.mxu0
        %v1418 = vadd.f32 %v872, %v1292
        %v1419 = vadd.f32 %v873, %v1295
        %v1420 = vadd.f32 %v874, %v1300
        %v1421 = vadd.f32 %v875, %v1303
        %v1422 = vadd.f32 %v876, %v1308
        %v1423 = vadd.f32 %v877, %v1311
        %v1424 = vadd.f32 %v878, %v1316
        %v1425 = vadd.f32 %v879, %v1319
        %v1426 = vadd.f32 %v880, %v1324
        %v1427 = vadd.f32 %v881, %v1327
        %v1428 = vadd.f32 %v882, %v1332
        %v1429 = vadd.f32 %v883, %v1335
        %v1430 = vadd.f32 %v884, %v1340
        %v1431 = vadd.f32 %v885, %v1343
        %v1432 = vadd.f32 %v886, %v1348
        %v1433 = vadd.f32 %v887, %v1351
        %v1434 = vadd.f32 %v888, %v1356
        %v1435 = vadd.f32 %v889, %v1359
        %v1436 = vadd.f32 %v890, %v1364
        %v1437 = vadd.f32 %v891, %v1367
        %v1438 = vadd.f32 %v892, %v1372
        %v1439 = vadd.f32 %v893, %v1375
        %v1440 = vadd.f32 %v894, %v1380
        %v1441 = vadd.f32 %v895, %v1383
        %v1442 = vadd.f32 %v896, %v1388
        %v1443 = vadd.f32 %v897, %v1391
        %v1444 = vadd.f32 %v898, %v1396
        %v1445 = vadd.f32 %v899, %v1399
        %v1446 = vadd.f32 %v900, %v1404
        %v1447 = vadd.f32 %v901, %v1407
        %v1448 = vadd.f32 %v902, %v1412
        %v1449 = vadd.f32 %v903, %v1415
        %vm1450 = vcmask 523264
        %1451 = vst.msk [vmem:[#allocation2] sm:$0xff] %vm1450, %v1418
        %1452 = vst.msk [vmem:[#allocation2 + $0x8] sm:$0xff] %vm1450, %v1419
        %1453 = vst.msk [vmem:[#allocation2 + $0x10] sm:$0xff] %vm1450, %v1420
        %1454 = vst.msk [vmem:[#allocation2 + $0x18] sm:$0xff] %vm1450, %v1421
        %1455 = vst.msk [vmem:[#allocation2 + $0x20] sm:$0xff] %vm1450, %v1422
        %1456 = vst.msk [vmem:[#allocation2 + $0x28] sm:$0xff] %vm1450, %v1423
        %1457 = vst.msk [vmem:[#allocation2 + $0x30] sm:$0xff] %vm1450, %v1424
        %1458 = vst.msk [vmem:[#allocation2 + $0x38] sm:$0xff] %vm1450, %v1425
        %1459 = vst.msk [vmem:[#allocation2 + $0x40] sm:$0xff] %vm1450, %v1426
        %1460 = vst.msk [vmem:[#allocation2 + $0x48] sm:$0xff] %vm1450, %v1427
        %1461 = vst.msk [vmem:[#allocation2 + $0x50] sm:$0xff] %vm1450, %v1428
        %1462 = vst.msk [vmem:[#allocation2 + $0x58] sm:$0xff] %vm1450, %v1429
        %1463 = vst.msk [vmem:[#allocation2 + $0x60] sm:$0xff] %vm1450, %v1430
        %1464 = vst.msk [vmem:[#allocation2 + $0x68] sm:$0xff] %vm1450, %v1431
        %1465 = vst.msk [vmem:[#allocation2 + $0x70] sm:$0xff] %vm1450, %v1432
        %1466 = vst.msk [vmem:[#allocation2 + $0x78] sm:$0xff] %vm1450, %v1433
        %1467 = vst.msk [vmem:[#allocation2 + $0x80] sm:$0xff] %vm1450, %v1434
        %1468 = vst.msk [vmem:[#allocation2 + $0x88] sm:$0xff] %vm1450, %v1435
        %1469 = vst.msk [vmem:[#allocation2 + $0x90] sm:$0xff] %vm1450, %v1436
        %1470 = vst.msk [vmem:[#allocation2 + $0x98] sm:$0xff] %vm1450, %v1437
        %1471 = vst.msk [vmem:[#allocation2 + $0xa0] sm:$0xff] %vm1450, %v1438
        %1472 = vst.msk [vmem:[#allocation2 + $0xa8] sm:$0xff] %vm1450, %v1439
        %1473 = vst.msk [vmem:[#allocation2 + $0xb0] sm:$0xff] %vm1450, %v1440
        %1474 = vst.msk [vmem:[#allocation2 + $0xb8] sm:$0xff] %vm1450, %v1441
        %1475 = vst.msk [vmem:[#allocation2 + $0xc0] sm:$0xff] %vm1450, %v1442
        %1476 = vst.msk [vmem:[#allocation2 + $0xc8] sm:$0xff] %vm1450, %v1443
        %1477 = vst.msk [vmem:[#allocation2 + $0xd0] sm:$0xff] %vm1450, %v1444
        %1478 = vst.msk [vmem:[#allocation2 + $0xd8] sm:$0xff] %vm1450, %v1445
        %1479 = vst.msk [vmem:[#allocation2 + $0xe0] sm:$0xff] %vm1450, %v1446
        %1480 = vst.msk [vmem:[#allocation2 + $0xe8] sm:$0xff] %vm1450, %v1447
        %1481 = vst.msk [vmem:[#allocation2 + $0xf0] sm:$0xff] %vm1450, %v1448
        %1482 = vst.msk [vmem:[#allocation2 + $0xf8] sm:$0xff] %vm1450, %v1449
        %v1483 = vld [vmem:[#allocation3] sm:$0xff]
        %v1484 = vld [vmem:[#allocation3 + $0x8] sm:$0xff]
        %v1485 = vld [vmem:[#allocation3 + $0x10] sm:$0xff]
        %v1486 = vld [vmem:[#allocation3 + $0x18] sm:$0xff]
        %v1487 = vld [vmem:[#allocation3 + $0x20] sm:$0xff]
        %v1488 = vld [vmem:[#allocation3 + $0x28] sm:$0xff]
        %v1489 = vld [vmem:[#allocation3 + $0x30] sm:$0xff]
        %v1490 = vld [vmem:[#allocation3 + $0x38] sm:$0xff]
        %v1491 = vld [vmem:[#allocation3 + $0x40] sm:$0xff]
        %v1492 = vld [vmem:[#allocation3 + $0x48] sm:$0xff]
        %v1493 = vld [vmem:[#allocation3 + $0x50] sm:$0xff]
        %v1494 = vld [vmem:[#allocation3 + $0x58] sm:$0xff]
        %v1495 = vld [vmem:[#allocation3 + $0x60] sm:$0xff]
        %v1496 = vld [vmem:[#allocation3 + $0x68] sm:$0xff]
        %v1497 = vld [vmem:[#allocation3 + $0x70] sm:$0xff]
        %v1498 = vld [vmem:[#allocation3 + $0x78] sm:$0xff]
        %v1499 = vld [vmem:[#allocation3 + $0x80] sm:$0xff]
        %v1500 = vld [vmem:[#allocation3 + $0x88] sm:$0xff]
        %v1501 = vld [vmem:[#allocation3 + $0x90] sm:$0xff]
        %v1502 = vld [vmem:[#allocation3 + $0x98] sm:$0xff]
        %v1503 = vld [vmem:[#allocation3 + $0xa0] sm:$0xff]
        %v1504 = vld [vmem:[#allocation3 + $0xa8] sm:$0xff]
        %v1505 = vld [vmem:[#allocation3 + $0xb0] sm:$0xff]
        %v1506 = vld [vmem:[#allocation3 + $0xb8] sm:$0xff]
        %v1507 = vld [vmem:[#allocation3 + $0xc0] sm:$0xff]
        %v1508 = vld [vmem:[#allocation3 + $0xc8] sm:$0xff]
        %v1509 = vld [vmem:[#allocation3 + $0xd0] sm:$0xff]
        %v1510 = vld [vmem:[#allocation3 + $0xd8] sm:$0xff]
        %v1511 = vld [vmem:[#allocation3 + $0xe0] sm:$0xff]
        %v1512 = vld [vmem:[#allocation3 + $0xe8] sm:$0xff]
        %v1513 = vld [vmem:[#allocation3 + $0xf0] sm:$0xff]
        %v1514 = vld [vmem:[#allocation3 + $0xf8] sm:$0xff]
        %v1579 = vunpack.c.l.b16 %v808
        %v1580 = vunpack.c.l.b16 %v809
        %v1581 = vunpack.c.l.b16 %v810
        %v1582 = vunpack.c.l.b16 %v811
        %v1583 = vunpack.c.l.b16 %v812
        %v1584 = vunpack.c.l.b16 %v813
        %v1585 = vunpack.c.l.b16 %v814
        %v1586 = vunpack.c.l.b16 %v815
        %v1587 = vunpack.c.l.b16 %v816
        %v1588 = vunpack.c.l.b16 %v817
        %v1589 = vunpack.c.l.b16 %v818
        %v1590 = vunpack.c.l.b16 %v819
        %v1591 = vunpack.c.l.b16 %v820
        %v1592 = vunpack.c.l.b16 %v821
        %v1593 = vunpack.c.l.b16 %v822
        %v1594 = vunpack.c.l.b16 %v823
        %v1595 = vunpack.c.l.b16 %v824
        %v1596 = vunpack.c.l.b16 %v825
        %v1597 = vunpack.c.l.b16 %v826
        %v1598 = vunpack.c.l.b16 %v827
        %v1599 = vunpack.c.l.b16 %v828
        %v1600 = vunpack.c.l.b16 %v829
        %v1601 = vunpack.c.l.b16 %v830
        %v1602 = vunpack.c.l.b16 %v831
        %v1603 = vunpack.c.l.b16 %v832
        %v1604 = vunpack.c.l.b16 %v833
        %v1605 = vunpack.c.l.b16 %v834
        %v1606 = vunpack.c.l.b16 %v835
        %v1607 = vunpack.c.l.b16 %v836
        %v1608 = vunpack.c.l.b16 %v837
        %v1609 = vunpack.c.l.b16 %v838
        %v1610 = vunpack.c.l.b16 %v839
        %v1611 = vunpack.c.l.b16 %v840
        %v1612 = vunpack.c.l.b16 %v841
        %v1613 = vunpack.c.l.b16 %v842
        %v1614 = vunpack.c.l.b16 %v843
        %v1615 = vunpack.c.l.b16 %v844
        %v1616 = vunpack.c.l.b16 %v845
        %v1617 = vunpack.c.l.b16 %v846
        %v1618 = vunpack.c.l.b16 %v847
        %v1619 = vunpack.c.l.b16 %v848
        %v1620 = vunpack.c.l.b16 %v849
        %v1621 = vunpack.c.l.b16 %v850
        %v1622 = vunpack.c.l.b16 %v851
        %v1623 = vunpack.c.l.b16 %v852
        %v1624 = vunpack.c.l.b16 %v853
        %v1625 = vunpack.c.l.b16 %v854
        %v1626 = vunpack.c.l.b16 %v855
        %v1627 = vunpack.c.l.b16 %v856
        %v1628 = vunpack.c.l.b16 %v857
        %v1629 = vunpack.c.l.b16 %v858
        %v1630 = vunpack.c.l.b16 %v859
        %v1631 = vunpack.c.l.b16 %v860
        %v1632 = vunpack.c.l.b16 %v861
        %v1633 = vunpack.c.l.b16 %v862
        %v1634 = vunpack.c.l.b16 %v863
        %v1635 = vunpack.c.l.b16 %v864
        %v1636 = vunpack.c.l.b16 %v865
        %v1637 = vunpack.c.l.b16 %v866
        %v1638 = vunpack.c.l.b16 %v867
        %v1639 = vunpack.c.l.b16 %v868
        %v1640 = vunpack.c.l.b16 %v869
        %v1641 = vunpack.c.l.b16 %v870
        %v1642 = vunpack.c.l.b16 %v871
        %v1643 = vpack.c.b16 %v1580, %v1579
        %v1644 = vpack.c.b16 %v1582, %v1581
        %v1645 = vpack.c.b16 %v1584, %v1583
        %v1646 = vpack.c.b16 %v1586, %v1585
        %v1647 = vpack.c.b16 %v1588, %v1587
        %v1648 = vpack.c.b16 %v1590, %v1589
        %v1649 = vpack.c.b16 %v1592, %v1591
        %v1650 = vpack.c.b16 %v1594, %v1593
        %v1651 = vpack.c.b16 %v1596, %v1595
        %v1652 = vpack.c.b16 %v1598, %v1597
        %v1653 = vpack.c.b16 %v1600, %v1599
        %v1654 = vpack.c.b16 %v1602, %v1601
        %v1655 = vpack.c.b16 %v1604, %v1603
        %v1656 = vpack.c.b16 %v1606, %v1605
        %v1657 = vpack.c.b16 %v1608, %v1607
        %v1658 = vpack.c.b16 %v1610, %v1609
        %v1659 = vpack.c.b16 %v1612, %v1611
        %v1660 = vpack.c.b16 %v1614, %v1613
        %v1661 = vpack.c.b16 %v1616, %v1615
        %v1662 = vpack.c.b16 %v1618, %v1617
        %v1663 = vpack.c.b16 %v1620, %v1619
        %v1664 = vpack.c.b16 %v1622, %v1621
        %v1665 = vpack.c.b16 %v1624, %v1623
        %v1666 = vpack.c.b16 %v1626, %v1625
        %v1667 = vpack.c.b16 %v1628, %v1627
        %v1668 = vpack.c.b16 %v1630, %v1629
        %v1669 = vpack.c.b16 %v1632, %v1631
        %v1670 = vpack.c.b16 %v1634, %v1633
        %v1671 = vpack.c.b16 %v1636, %v1635
        %v1672 = vpack.c.b16 %v1638, %v1637
        %v1673 = vpack.c.b16 %v1640, %v1639
        %v1674 = vpack.c.b16 %v1642, %v1641
        %1707 = vmatprep.subr.bf16.mxu0 0
        %1708 = vmatpush1.bf16.msra.mxu0 %v1643
        %1709 = vmatprep.subr.bf16.mxu0 0
        %1710 = vmatpush1.bf16.msra.mxu0 %v1644
        %1711 = vmatprep.subr.bf16.mxu0 0
        %1712 = vmatpush1.bf16.msra.mxu0 %v1645
        %1713 = vmatprep.subr.bf16.mxu0 0
        %1714 = vmatpush1.bf16.msra.mxu0 %v1646
        %1715 = vmatprep.subr.bf16.mxu0 0
        %1716 = vmatpush1.bf16.msra.mxu0 %v1647
        %1717 = vmatprep.subr.bf16.mxu0 0
        %1718 = vmatpush1.bf16.msra.mxu0 %v1648
        %1719 = vmatprep.subr.bf16.mxu0 0
        %1720 = vmatpush1.bf16.msra.mxu0 %v1649
        %1721 = vmatprep.subr.bf16.mxu0 0
        %1722 = vmatpush1.bf16.msra.mxu0 %v1650
        %1723 = vmatprep.subr.bf16.mxu0 0
        %1724 = vmatpush1.bf16.msra.mxu0 %v1651
        %1725 = vmatprep.subr.bf16.mxu0 0
        %1726 = vmatpush1.bf16.msra.mxu0 %v1652
        %1727 = vmatprep.subr.bf16.mxu0 0
        %1728 = vmatpush1.bf16.msra.mxu0 %v1653
        %1729 = vmatprep.subr.bf16.mxu0 0
        %1730 = vmatpush1.bf16.msra.mxu0 %v1654
        %1731 = vmatprep.subr.bf16.mxu0 0
        %1732 = vmatpush1.bf16.msra.mxu0 %v1655
        %1733 = vmatprep.subr.bf16.mxu0 0
        %1734 = vmatpush1.bf16.msra.mxu0 %v1656
        %1735 = vmatprep.subr.bf16.mxu0 0
        %1736 = vmatpush1.bf16.msra.mxu0 %v1657
        %1737 = vmatprep.subr.bf16.mxu0 0
        %1738 = vmatpush1.bf16.msra.mxu0 %v1658
        %1739 = vmatprep.mubr.bf16.mxu0 %v674
        %1740 = vmatmul.mubr.bf16.gmra.mrb[0].mxu0 %v673
        %v1741 = vpop.f32.mrb[0].mxu0
        %v1742 = vadd.f32 0.0, %v1741
        %v1743 = vpop.f32.mrb[0].mxu0
        %v1744 = vpop.f32.mrb[0].mxu0
        %v1745 = vadd.f32 0.0, %v1744
        %v1746 = vpop.f32.mrb[0].mxu0
        %1747 = vmatprep.mubr.bf16.mxu0 %v678
        %1748 = vmatmul.mubr.bf16.gmra.mrb[0].mxu0 %v677
        %v1749 = vpop.f32.mrb[0].mxu0
        %v1750 = vadd.f32 0.0, %v1749
        %v1751 = vpop.f32.mrb[0].mxu0
        %v1752 = vpop.f32.mrb[0].mxu0
        %v1753 = vadd.f32 0.0, %v1752
        %v1754 = vpop.f32.mrb[0].mxu0
        %1755 = vmatprep.mubr.bf16.mxu0 %v682
        %1756 = vmatmul.mubr.bf16.gmra.mrb[0].mxu0 %v681
        %v1757 = vpop.f32.mrb[0].mxu0
        %v1758 = vadd.f32 0.0, %v1757
        %v1759 = vpop.f32.mrb[0].mxu0
        %v1760 = vpop.f32.mrb[0].mxu0
        %v1761 = vadd.f32 0.0, %v1760
        %v1762 = vpop.f32.mrb[0].mxu0
        %1763 = vmatprep.mubr.bf16.mxu0 %v686
        %1764 = vmatmul.mubr.bf16.gmra.mrb[0].mxu0 %v685
        %v1765 = vpop.f32.mrb[0].mxu0
        %v1766 = vadd.f32 0.0, %v1765
        %v1767 = vpop.f32.mrb[0].mxu0
        %v1768 = vpop.f32.mrb[0].mxu0
        %v1769 = vadd.f32 0.0, %v1768
        %v1770 = vpop.f32.mrb[0].mxu0
        %1771 = vmatprep.mubr.bf16.mxu0 %v690
        %1772 = vmatmul.mubr.bf16.gmra.mrb[0].mxu0 %v689
        %v1773 = vpop.f32.mrb[0].mxu0
        %v1774 = vadd.f32 0.0, %v1773
        %v1775 = vpop.f32.mrb[0].mxu0
        %v1776 = vpop.f32.mrb[0].mxu0
        %v1777 = vadd.f32 0.0, %v1776
        %v1778 = vpop.f32.mrb[0].mxu0
        %1779 = vmatprep.mubr.bf16.mxu0 %v694
        %1780 = vmatmul.mubr.bf16.gmra.mrb[0].mxu0 %v693
        %v1781 = vpop.f32.mrb[0].mxu0
        %v1782 = vadd.f32 0.0, %v1781
        %v1783 = vpop.f32.mrb[0].mxu0
        %v1784 = vpop.f32.mrb[0].mxu0
        %v1785 = vadd.f32 0.0, %v1784
        %v1786 = vpop.f32.mrb[0].mxu0
        %1787 = vmatprep.mubr.bf16.mxu0 %v698
        %1788 = vmatmul.mubr.bf16.gmra.mrb[0].mxu0 %v697
        %v1789 = vpop.f32.mrb[0].mxu0
        %v1790 = vadd.f32 0.0, %v1789
        %v1791 = vpop.f32.mrb[0].mxu0
        %v1792 = vpop.f32.mrb[0].mxu0
        %v1793 = vadd.f32 0.0, %v1792
        %v1794 = vpop.f32.mrb[0].mxu0
        %1795 = vmatprep.mubr.bf16.mxu0 %v702
        %1796 = vmatmul.mubr.bf16.gmra.mrb[0].mxu0 %v701
        %v1797 = vpop.f32.mrb[0].mxu0
        %v1798 = vadd.f32 0.0, %v1797
        %v1799 = vpop.f32.mrb[0].mxu0
        %v1800 = vpop.f32.mrb[0].mxu0
        %v1801 = vadd.f32 0.0, %v1800
        %v1802 = vpop.f32.mrb[0].mxu0
        %1803 = vmatprep.mubr.bf16.mxu0 %v706
        %1804 = vmatmul.mubr.bf16.gmra.mrb[0].mxu0 %v705
        %v1805 = vpop.f32.mrb[0].mxu0
        %v1806 = vadd.f32 0.0, %v1805
        %v1807 = vpop.f32.mrb[0].mxu0
        %v1808 = vpop.f32.mrb[0].mxu0
        %v1809 = vadd.f32 0.0, %v1808
        %v1810 = vpop.f32.mrb[0].mxu0
        %1811 = vmatprep.mubr.bf16.mxu0 %v710
        %1812 = vmatmul.mubr.bf16.gmra.mrb[0].mxu0 %v709
        %v1813 = vpop.f32.mrb[0].mxu0
        %v1814 = vadd.f32 0.0, %v1813
        %v1815 = vpop.f32.mrb[0].mxu0
        %v1816 = vpop.f32.mrb[0].mxu0
        %v1817 = vadd.f32 0.0, %v1816
        %v1818 = vpop.f32.mrb[0].mxu0
        %1819 = vmatprep.mubr.bf16.mxu0 %v714
        %1820 = vmatmul.mubr.bf16.gmra.mrb[0].mxu0 %v713
        %v1821 = vpop.f32.mrb[0].mxu0
        %v1822 = vadd.f32 0.0, %v1821
        %v1823 = vpop.f32.mrb[0].mxu0
        %v1824 = vpop.f32.mrb[0].mxu0
        %v1825 = vadd.f32 0.0, %v1824
        %v1826 = vpop.f32.mrb[0].mxu0
        %1827 = vmatprep.mubr.bf16.mxu0 %v718
        %1828 = vmatmul.mubr.bf16.gmra.mrb[0].mxu0 %v717
        %v1829 = vpop.f32.mrb[0].mxu0
        %v1830 = vadd.f32 0.0, %v1829
        %v1831 = vpop.f32.mrb[0].mxu0
        %v1832 = vpop.f32.mrb[0].mxu0
        %v1833 = vadd.f32 0.0, %v1832
        %v1834 = vpop.f32.mrb[0].mxu0
        %1835 = vmatprep.mubr.bf16.mxu0 %v722
        %1836 = vmatmul.mubr.bf16.gmra.mrb[0].mxu0 %v721
        %v1837 = vpop.f32.mrb[0].mxu0
        %v1838 = vadd.f32 0.0, %v1837
        %v1839 = vpop.f32.mrb[0].mxu0
        %v1840 = vpop.f32.mrb[0].mxu0
        %v1841 = vadd.f32 0.0, %v1840
        %v1842 = vpop.f32.mrb[0].mxu0
        %1843 = vmatprep.mubr.bf16.mxu0 %v726
        %1844 = vmatmul.mubr.bf16.gmra.mrb[0].mxu0 %v725
        %v1845 = vpop.f32.mrb[0].mxu0
        %v1846 = vadd.f32 0.0, %v1845
        %v1847 = vpop.f32.mrb[0].mxu0
        %v1848 = vpop.f32.mrb[0].mxu0
        %v1849 = vadd.f32 0.0, %v1848
        %v1850 = vpop.f32.mrb[0].mxu0
        %1851 = vmatprep.mubr.bf16.mxu0 %v730
        %1852 = vmatmul.mubr.bf16.gmra.mrb[0].mxu0 %v729
        %v1853 = vpop.f32.mrb[0].mxu0
        %v1854 = vadd.f32 0.0, %v1853
        %v1855 = vpop.f32.mrb[0].mxu0
        %v1856 = vpop.f32.mrb[0].mxu0
        %v1857 = vadd.f32 0.0, %v1856
        %v1858 = vpop.f32.mrb[0].mxu0
        %1859 = vmatprep.mubr.bf16.mxu0 %v734
        %1860 = vmatmul.mubr.bf16.gmra.mrb[0].mxu0 %v733
        %v1861 = vpop.f32.mrb[0].mxu0
        %v1862 = vadd.f32 0.0, %v1861
        %v1863 = vpop.f32.mrb[0].mxu0
        %v1864 = vpop.f32.mrb[0].mxu0
        %v1865 = vadd.f32 0.0, %v1864
        %v1866 = vpop.f32.mrb[0].mxu0
        %1867 = vdwg.mxu0
        %1868 = vmatprep.subr.bf16.mxu0 0
        %1869 = vmatpush1.bf16.msra.mxu0 %v1659
        %1870 = vmatprep.subr.bf16.mxu0 0
        %1871 = vmatpush1.bf16.msra.mxu0 %v1660
        %1872 = vmatprep.subr.bf16.mxu0 0
        %1873 = vmatpush1.bf16.msra.mxu0 %v1661
        %1874 = vmatprep.subr.bf16.mxu0 0
        %1875 = vmatpush1.bf16.msra.mxu0 %v1662
        %1876 = vmatprep.subr.bf16.mxu0 0
        %1877 = vmatpush1.bf16.msra.mxu0 %v1663
        %1878 = vmatprep.subr.bf16.mxu0 0
        %1879 = vmatpush1.bf16.msra.mxu0 %v1664
        %1880 = vmatprep.subr.bf16.mxu0 0
        %1881 = vmatpush1.bf16.msra.mxu0 %v1665
        %1882 = vmatprep.subr.bf16.mxu0 0
        %1883 = vmatpush1.bf16.msra.mxu0 %v1666
        %1884 = vmatprep.subr.bf16.mxu0 0
        %1885 = vmatpush1.bf16.msra.mxu0 %v1667
        %1886 = vmatprep.subr.bf16.mxu0 0
        %1887 = vmatpush1.bf16.msra.mxu0 %v1668
        %1888 = vmatprep.subr.bf16.mxu0 0
        %1889 = vmatpush1.bf16.msra.mxu0 %v1669
        %1890 = vmatprep.subr.bf16.mxu0 0
        %1891 = vmatpush1.bf16.msra.mxu0 %v1670
        %1892 = vmatprep.subr.bf16.mxu0 0
        %1893 = vmatpush1.bf16.msra.mxu0 %v1671
        %1894 = vmatprep.subr.bf16.mxu0 0
        %1895 = vmatpush1.bf16.msra.mxu0 %v1672
        %1896 = vmatprep.subr.bf16.mxu0 0
        %1897 = vmatpush1.bf16.msra.mxu0 %v1673
        %1898 = vmatprep.subr.bf16.mxu0 0
        %1899 = vmatpush1.bf16.msra.mxu0 %v1674
        %1900 = vmatprep.mubr.bf16.mxu0 %v676
        %1901 = vmatmul.mubr.bf16.gmra.mrb[0].mxu0 %v675
        %v1902 = vpop.f32.mrb[0].mxu0
        %v1903 = vadd.f32 %v1742, %v1902
        %v1904 = vpop.f32.mrb[0].mxu0
        %v1905 = vpop.f32.mrb[0].mxu0
        %v1906 = vadd.f32 %v1745, %v1905
        %v1907 = vpop.f32.mrb[0].mxu0
        %1908 = vmatprep.mubr.bf16.mxu0 %v680
        %1909 = vmatmul.mubr.bf16.gmra.mrb[0].mxu0 %v679
        %v1910 = vpop.f32.mrb[0].mxu0
        %v1911 = vadd.f32 %v1750, %v1910
        %v1912 = vpop.f32.mrb[0].mxu0
        %v1913 = vpop.f32.mrb[0].mxu0
        %v1914 = vadd.f32 %v1753, %v1913
        %v1915 = vpop.f32.mrb[0].mxu0
        %1916 = vmatprep.mubr.bf16.mxu0 %v684
        %1917 = vmatmul.mubr.bf16.gmra.mrb[0].mxu0 %v683
        %v1918 = vpop.f32.mrb[0].mxu0
        %v1919 = vadd.f32 %v1758, %v1918
        %v1920 = vpop.f32.mrb[0].mxu0
        %v1921 = vpop.f32.mrb[0].mxu0
        %v1922 = vadd.f32 %v1761, %v1921
        %v1923 = vpop.f32.mrb[0].mxu0
        %1924 = vmatprep.mubr.bf16.mxu0 %v688
        %1925 = vmatmul.mubr.bf16.gmra.mrb[0].mxu0 %v687
        %v1926 = vpop.f32.mrb[0].mxu0
        %v1927 = vadd.f32 %v1766, %v1926
        %v1928 = vpop.f32.mrb[0].mxu0
        %v1929 = vpop.f32.mrb[0].mxu0
        %v1930 = vadd.f32 %v1769, %v1929
        %v1931 = vpop.f32.mrb[0].mxu0
        %1932 = vmatprep.mubr.bf16.mxu0 %v692
        %1933 = vmatmul.mubr.bf16.gmra.mrb[0].mxu0 %v691
        %v1934 = vpop.f32.mrb[0].mxu0
        %v1935 = vadd.f32 %v1774, %v1934
        %v1936 = vpop.f32.mrb[0].mxu0
        %v1937 = vpop.f32.mrb[0].mxu0
        %v1938 = vadd.f32 %v1777, %v1937
        %v1939 = vpop.f32.mrb[0].mxu0
        %1940 = vmatprep.mubr.bf16.mxu0 %v696
        %1941 = vmatmul.mubr.bf16.gmra.mrb[0].mxu0 %v695
        %v1942 = vpop.f32.mrb[0].mxu0
        %v1943 = vadd.f32 %v1782, %v1942
        %v1944 = vpop.f32.mrb[0].mxu0
        %v1945 = vpop.f32.mrb[0].mxu0
        %v1946 = vadd.f32 %v1785, %v1945
        %v1947 = vpop.f32.mrb[0].mxu0
        %1948 = vmatprep.mubr.bf16.mxu0 %v700
        %1949 = vmatmul.mubr.bf16.gmra.mrb[0].mxu0 %v699
        %v1950 = vpop.f32.mrb[0].mxu0
        %v1951 = vadd.f32 %v1790, %v1950
        %v1952 = vpop.f32.mrb[0].mxu0
        %v1953 = vpop.f32.mrb[0].mxu0
        %v1954 = vadd.f32 %v1793, %v1953
        %v1955 = vpop.f32.mrb[0].mxu0
        %1956 = vmatprep.mubr.bf16.mxu0 %v704
        %1957 = vmatmul.mubr.bf16.gmra.mrb[0].mxu0 %v703
        %v1958 = vpop.f32.mrb[0].mxu0
        %v1959 = vadd.f32 %v1798, %v1958
        %v1960 = vpop.f32.mrb[0].mxu0
        %v1961 = vpop.f32.mrb[0].mxu0
        %v1962 = vadd.f32 %v1801, %v1961
        %v1963 = vpop.f32.mrb[0].mxu0
        %1964 = vmatprep.mubr.bf16.mxu0 %v708
        %1965 = vmatmul.mubr.bf16.gmra.mrb[0].mxu0 %v707
        %v1966 = vpop.f32.mrb[0].mxu0
        %v1967 = vadd.f32 %v1806, %v1966
        %v1968 = vpop.f32.mrb[0].mxu0
        %v1969 = vpop.f32.mrb[0].mxu0
        %v1970 = vadd.f32 %v1809, %v1969
        %v1971 = vpop.f32.mrb[0].mxu0
        %1972 = vmatprep.mubr.bf16.mxu0 %v712
        %1973 = vmatmul.mubr.bf16.gmra.mrb[0].mxu0 %v711
        %v1974 = vpop.f32.mrb[0].mxu0
        %v1975 = vadd.f32 %v1814, %v1974
        %v1976 = vpop.f32.mrb[0].mxu0
        %v1977 = vpop.f32.mrb[0].mxu0
        %v1978 = vadd.f32 %v1817, %v1977
        %v1979 = vpop.f32.mrb[0].mxu0
        %1980 = vmatprep.mubr.bf16.mxu0 %v716
        %1981 = vmatmul.mubr.bf16.gmra.mrb[0].mxu0 %v715
        %v1982 = vpop.f32.mrb[0].mxu0
        %v1983 = vadd.f32 %v1822, %v1982
        %v1984 = vpop.f32.mrb[0].mxu0
        %v1985 = vpop.f32.mrb[0].mxu0
        %v1986 = vadd.f32 %v1825, %v1985
        %v1987 = vpop.f32.mrb[0].mxu0
        %1988 = vmatprep.mubr.bf16.mxu0 %v720
        %1989 = vmatmul.mubr.bf16.gmra.mrb[0].mxu0 %v719
        %v1990 = vpop.f32.mrb[0].mxu0
        %v1991 = vadd.f32 %v1830, %v1990
        %v1992 = vpop.f32.mrb[0].mxu0
        %v1993 = vpop.f32.mrb[0].mxu0
        %v1994 = vadd.f32 %v1833, %v1993
        %v1995 = vpop.f32.mrb[0].mxu0
        %1996 = vmatprep.mubr.bf16.mxu0 %v724
        %1997 = vmatmul.mubr.bf16.gmra.mrb[0].mxu0 %v723
        %v1998 = vpop.f32.mrb[0].mxu0
        %v1999 = vadd.f32 %v1838, %v1998
        %v2000 = vpop.f32.mrb[0].mxu0
        %v2001 = vpop.f32.mrb[0].mxu0
        %v2002 = vadd.f32 %v1841, %v2001
        %v2003 = vpop.f32.mrb[0].mxu0
        %2004 = vmatprep.mubr.bf16.mxu0 %v728
        %2005 = vmatmul.mubr.bf16.gmra.mrb[0].mxu0 %v727
        %v2006 = vpop.f32.mrb[0].mxu0
        %v2007 = vadd.f32 %v1846, %v2006
        %v2008 = vpop.f32.mrb[0].mxu0
        %v2009 = vpop.f32.mrb[0].mxu0
        %v2010 = vadd.f32 %v1849, %v2009
        %v2011 = vpop.f32.mrb[0].mxu0
        %2012 = vmatprep.mubr.bf16.mxu0 %v732
        %2013 = vmatmul.mubr.bf16.gmra.mrb[0].mxu0 %v731
        %v2014 = vpop.f32.mrb[0].mxu0
        %v2015 = vadd.f32 %v1854, %v2014
        %v2016 = vpop.f32.mrb[0].mxu0
        %v2017 = vpop.f32.mrb[0].mxu0
        %v2018 = vadd.f32 %v1857, %v2017
        %v2019 = vpop.f32.mrb[0].mxu0
        %2020 = vmatprep.mubr.bf16.mxu0 %v736
        %2021 = vmatmul.mubr.bf16.gmra.mrb[0].mxu0 %v735
        %v2022 = vpop.f32.mrb[0].mxu0
        %v2023 = vadd.f32 %v1862, %v2022
        %v2024 = vpop.f32.mrb[0].mxu0
        %v2025 = vpop.f32.mrb[0].mxu0
        %v2026 = vadd.f32 %v1865, %v2025
        %v2027 = vpop.f32.mrb[0].mxu0
        %2028 = vdwg.mxu0
        %v2029 = vadd.f32 %v1483, %v1903
        %v2030 = vadd.f32 %v1484, %v1906
        %v2031 = vadd.f32 %v1485, %v1911
        %v2032 = vadd.f32 %v1486, %v1914
        %v2033 = vadd.f32 %v1487, %v1919
        %v2034 = vadd.f32 %v1488, %v1922
        %v2035 = vadd.f32 %v1489, %v1927
        %v2036 = vadd.f32 %v1490, %v1930
        %v2037 = vadd.f32 %v1491, %v1935
        %v2038 = vadd.f32 %v1492, %v1938
        %v2039 = vadd.f32 %v1493, %v1943
        %v2040 = vadd.f32 %v1494, %v1946
        %v2041 = vadd.f32 %v1495, %v1951
        %v2042 = vadd.f32 %v1496, %v1954
        %v2043 = vadd.f32 %v1497, %v1959
        %v2044 = vadd.f32 %v1498, %v1962
        %v2045 = vadd.f32 %v1499, %v1967
        %v2046 = vadd.f32 %v1500, %v1970
        %v2047 = vadd.f32 %v1501, %v1975
        %v2048 = vadd.f32 %v1502, %v1978
        %v2049 = vadd.f32 %v1503, %v1983
        %v2050 = vadd.f32 %v1504, %v1986
        %v2051 = vadd.f32 %v1505, %v1991
        %v2052 = vadd.f32 %v1506, %v1994
        %v2053 = vadd.f32 %v1507, %v1999
        %v2054 = vadd.f32 %v1508, %v2002
        %v2055 = vadd.f32 %v1509, %v2007
        %v2056 = vadd.f32 %v1510, %v2010
        %v2057 = vadd.f32 %v1511, %v2015
        %v2058 = vadd.f32 %v1512, %v2018
        %v2059 = vadd.f32 %v1513, %v2023
        %v2060 = vadd.f32 %v1514, %v2026
        %2061 = vst.msk [vmem:[#allocation3] sm:$0xff] %vm1450, %v2029
        %2062 = vst.msk [vmem:[#allocation3 + $0x8] sm:$0xff] %vm1450, %v2030
        %2063 = vst.msk [vmem:[#allocation3 + $0x10] sm:$0xff] %vm1450, %v2031
        %2064 = vst.msk [vmem:[#allocation3 + $0x18] sm:$0xff] %vm1450, %v2032
        %2065 = vst.msk [vmem:[#allocation3 + $0x20] sm:$0xff] %vm1450, %v2033
        %2066 = vst.msk [vmem:[#allocation3 + $0x28] sm:$0xff] %vm1450, %v2034
        %2067 = vst.msk [vmem:[#allocation3 + $0x30] sm:$0xff] %vm1450, %v2035
        %2068 = vst.msk [vmem:[#allocation3 + $0x38] sm:$0xff] %vm1450, %v2036
        %2069 = vst.msk [vmem:[#allocation3 + $0x40] sm:$0xff] %vm1450, %v2037
        %2070 = vst.msk [vmem:[#allocation3 + $0x48] sm:$0xff] %vm1450, %v2038
        %2071 = vst.msk [vmem:[#allocation3 + $0x50] sm:$0xff] %vm1450, %v2039
        %2072 = vst.msk [vmem:[#allocation3 + $0x58] sm:$0xff] %vm1450, %v2040
        %2073 = vst.msk [vmem:[#allocation3 + $0x60] sm:$0xff] %vm1450, %v2041
        %2074 = vst.msk [vmem:[#allocation3 + $0x68] sm:$0xff] %vm1450, %v2042
        %2075 = vst.msk [vmem:[#allocation3 + $0x70] sm:$0xff] %vm1450, %v2043
        %2076 = vst.msk [vmem:[#allocation3 + $0x78] sm:$0xff] %vm1450, %v2044
        %2077 = vst.msk [vmem:[#allocation3 + $0x80] sm:$0xff] %vm1450, %v2045
        %2078 = vst.msk [vmem:[#allocation3 + $0x88] sm:$0xff] %vm1450, %v2046
        %2079 = vst.msk [vmem:[#allocation3 + $0x90] sm:$0xff] %vm1450, %v2047
        %2080 = vst.msk [vmem:[#allocation3 + $0x98] sm:$0xff] %vm1450, %v2048
        %2081 = vst.msk [vmem:[#allocation3 + $0xa0] sm:$0xff] %vm1450, %v2049
        %2082 = vst.msk [vmem:[#allocation3 + $0xa8] sm:$0xff] %vm1450, %v2050
        %2083 = vst.msk [vmem:[#allocation3 + $0xb0] sm:$0xff] %vm1450, %v2051
        %2084 = vst.msk [vmem:[#allocation3 + $0xb8] sm:$0xff] %vm1450, %v2052
        %2085 = vst.msk [vmem:[#allocation3 + $0xc0] sm:$0xff] %vm1450, %v2053
        %2086 = vst.msk [vmem:[#allocation3 + $0xc8] sm:$0xff] %vm1450, %v2054
        %2087 = vst.msk [vmem:[#allocation3 + $0xd0] sm:$0xff] %vm1450, %v2055
        %2088 = vst.msk [vmem:[#allocation3 + $0xd8] sm:$0xff] %vm1450, %v2056
        %2089 = vst.msk [vmem:[#allocation3 + $0xe0] sm:$0xff] %vm1450, %v2057
        %2090 = vst.msk [vmem:[#allocation3 + $0xe8] sm:$0xff] %vm1450, %v2058
        %2091 = vst.msk [vmem:[#allocation3 + $0xf0] sm:$0xff] %vm1450, %v2059
        %2092 = vst.msk [vmem:[#allocation3 + $0xf8] sm:$0xff] %vm1450, %v2060
        // Predicated region
        $region49: #{tpu_custom_call.1} parent=35 // pred_check
          %p2093 = pneg %p284
        $region50: #{tpu_custom_call.1} parent=35 // pred_check_branch
          %2095 = sbr.rel (%p2093) target = $region52
        $region51: #{tpu_custom_call.1} parent=35 // pred_region
          %v2096 = vld [vmem:[#allocation2] sm:$0xff]
          %v2097 = vld [vmem:[#allocation2 + $0x8] sm:$0xff]
          %v2098 = vld [vmem:[#allocation2 + $0x10] sm:$0xff]
          %v2099 = vld [vmem:[#allocation2 + $0x18] sm:$0xff]
          %v2100 = vld [vmem:[#allocation2 + $0x20] sm:$0xff]
          %v2101 = vld [vmem:[#allocation2 + $0x28] sm:$0xff]
          %v2102 = vld [vmem:[#allocation2 + $0x30] sm:$0xff]
          %v2103 = vld [vmem:[#allocation2 + $0x38] sm:$0xff]
          %v2104 = vld [vmem:[#allocation2 + $0x40] sm:$0xff]
          %v2105 = vld [vmem:[#allocation2 + $0x48] sm:$0xff]
          %v2106 = vld [vmem:[#allocation2 + $0x50] sm:$0xff]
          %v2107 = vld [vmem:[#allocation2 + $0x58] sm:$0xff]
          %v2108 = vld [vmem:[#allocation2 + $0x60] sm:$0xff]
          %v2109 = vld [vmem:[#allocation2 + $0x68] sm:$0xff]
          %v2110 = vld [vmem:[#allocation2 + $0x70] sm:$0xff]
          %v2111 = vld [vmem:[#allocation2 + $0x78] sm:$0xff]
          %v2112 = vld [vmem:[#allocation2 + $0x80] sm:$0xff]
          %v2113 = vld [vmem:[#allocation2 + $0x88] sm:$0xff]
          %v2114 = vld [vmem:[#allocation2 + $0x90] sm:$0xff]
          %v2115 = vld [vmem:[#allocation2 + $0x98] sm:$0xff]
          %v2116 = vld [vmem:[#allocation2 + $0xa0] sm:$0xff]
          %v2117 = vld [vmem:[#allocation2 + $0xa8] sm:$0xff]
          %v2118 = vld [vmem:[#allocation2 + $0xb0] sm:$0xff]
          %v2119 = vld [vmem:[#allocation2 + $0xb8] sm:$0xff]
          %v2120 = vld [vmem:[#allocation2 + $0xc0] sm:$0xff]
          %v2121 = vld [vmem:[#allocation2 + $0xc8] sm:$0xff]
          %v2122 = vld [vmem:[#allocation2 + $0xd0] sm:$0xff]
          %v2123 = vld [vmem:[#allocation2 + $0xd8] sm:$0xff]
          %v2124 = vld [vmem:[#allocation2 + $0xe0] sm:$0xff]
          %v2125 = vld [vmem:[#allocation2 + $0xe8] sm:$0xff]
          %v2126 = vld [vmem:[#allocation2 + $0xf0] sm:$0xff]
          %v2127 = vld [vmem:[#allocation2 + $0xf8] sm:$0xff]
          %vm2128 = vcmp.ge.f32.partialorder %v2096, 0.0
          %vm2129 = vcmp.ge.f32.partialorder %v2097, 0.0
          %vm2130 = vcmp.ge.f32.partialorder %v2098, 0.0
          %vm2131 = vcmp.ge.f32.partialorder %v2099, 0.0
          %vm2132 = vcmp.ge.f32.partialorder %v2100, 0.0
          %vm2133 = vcmp.ge.f32.partialorder %v2101, 0.0
          %vm2134 = vcmp.ge.f32.partialorder %v2102, 0.0
          %vm2135 = vcmp.ge.f32.partialorder %v2103, 0.0
          %vm2136 = vcmp.ge.f32.partialorder %v2104, 0.0
          %vm2137 = vcmp.ge.f32.partialorder %v2105, 0.0
          %vm2138 = vcmp.ge.f32.partialorder %v2106, 0.0
          %vm2139 = vcmp.ge.f32.partialorder %v2107, 0.0
          %vm2140 = vcmp.ge.f32.partialorder %v2108, 0.0
          %vm2141 = vcmp.ge.f32.partialorder %v2109, 0.0
          %vm2142 = vcmp.ge.f32.partialorder %v2110, 0.0
          %vm2143 = vcmp.ge.f32.partialorder %v2111, 0.0
          %vm2144 = vcmp.ge.f32.partialorder %v2112, 0.0
          %vm2145 = vcmp.ge.f32.partialorder %v2113, 0.0
          %vm2146 = vcmp.ge.f32.partialorder %v2114, 0.0
          %vm2147 = vcmp.ge.f32.partialorder %v2115, 0.0
          %vm2148 = vcmp.ge.f32.partialorder %v2116, 0.0
          %vm2149 = vcmp.ge.f32.partialorder %v2117, 0.0
          %vm2150 = vcmp.ge.f32.partialorder %v2118, 0.0
          %vm2151 = vcmp.ge.f32.partialorder %v2119, 0.0
          %vm2152 = vcmp.ge.f32.partialorder %v2120, 0.0
          %vm2153 = vcmp.ge.f32.partialorder %v2121, 0.0
          %vm2154 = vcmp.ge.f32.partialorder %v2122, 0.0
          %vm2155 = vcmp.ge.f32.partialorder %v2123, 0.0
          %vm2156 = vcmp.ge.f32.partialorder %v2124, 0.0
          %vm2157 = vcmp.ge.f32.partialorder %v2125, 0.0
          %vm2158 = vcmp.ge.f32.partialorder %v2126, 0.0
          %vm2159 = vcmp.ge.f32.partialorder %v2127, 0.0
          %v2160 = vmul.f32 %v2096, 0.01
          %v2161 = vmul.f32 %v2097, 0.01
          %v2162 = vmul.f32 %v2098, 0.01
          %v2163 = vmul.f32 %v2099, 0.01
          %v2164 = vmul.f32 %v2100, 0.01
          %v2165 = vmul.f32 %v2101, 0.01
          %v2166 = vmul.f32 %v2102, 0.01
          %v2167 = vmul.f32 %v2103, 0.01
          %v2168 = vmul.f32 %v2104, 0.01
          %v2169 = vmul.f32 %v2105, 0.01
          %v2170 = vmul.f32 %v2106, 0.01
          %v2171 = vmul.f32 %v2107, 0.01
          %v2172 = vmul.f32 %v2108, 0.01
          %v2173 = vmul.f32 %v2109, 0.01
          %v2174 = vmul.f32 %v2110, 0.01
          %v2175 = vmul.f32 %v2111, 0.01
          %v2176 = vmul.f32 %v2112, 0.01
          %v2177 = vmul.f32 %v2113, 0.01
          %v2178 = vmul.f32 %v2114, 0.01
          %v2179 = vmul.f32 %v2115, 0.01
          %v2180 = vmul.f32 %v2116, 0.01
          %v2181 = vmul.f32 %v2117, 0.01
          %v2182 = vmul.f32 %v2118, 0.01
          %v2183 = vmul.f32 %v2119, 0.01
          %v2184 = vmul.f32 %v2120, 0.01
          %v2185 = vmul.f32 %v2121, 0.01
          %v2186 = vmul.f32 %v2122, 0.01
          %v2187 = vmul.f32 %v2123, 0.01
          %v2188 = vmul.f32 %v2124, 0.01
          %v2189 = vmul.f32 %v2125, 0.01
          %v2190 = vmul.f32 %v2126, 0.01
          %v2191 = vmul.f32 %v2127, 0.01
          %v2192 = vsel %vm2128, %v2096, %v2160
          %v2193 = vsel %vm2129, %v2097, %v2161
          %v2194 = vsel %vm2130, %v2098, %v2162
          %v2195 = vsel %vm2131, %v2099, %v2163
          %v2196 = vsel %vm2132, %v2100, %v2164
          %v2197 = vsel %vm2133, %v2101, %v2165
          %v2198 = vsel %vm2134, %v2102, %v2166
          %v2199 = vsel %vm2135, %v2103, %v2167
          %v2200 = vsel %vm2136, %v2104, %v2168
          %v2201 = vsel %vm2137, %v2105, %v2169
          %v2202 = vsel %vm2138, %v2106, %v2170
          %v2203 = vsel %vm2139, %v2107, %v2171
          %v2204 = vsel %vm2140, %v2108, %v2172
          %v2205 = vsel %vm2141, %v2109, %v2173
          %v2206 = vsel %vm2142, %v2110, %v2174
          %v2207 = vsel %vm2143, %v2111, %v2175
          %v2208 = vsel %vm2144, %v2112, %v2176
          %v2209 = vsel %vm2145, %v2113, %v2177
          %v2210 = vsel %vm2146, %v2114, %v2178
          %v2211 = vsel %vm2147, %v2115, %v2179
          %v2212 = vsel %vm2148, %v2116, %v2180
          %v2213 = vsel %vm2149, %v2117, %v2181
          %v2214 = vsel %vm2150, %v2118, %v2182
          %v2215 = vsel %vm2151, %v2119, %v2183
          %v2216 = vsel %vm2152, %v2120, %v2184
          %v2217 = vsel %vm2153, %v2121, %v2185
          %v2218 = vsel %vm2154, %v2122, %v2186
          %v2219 = vsel %vm2155, %v2123, %v2187
          %v2220 = vsel %vm2156, %v2124, %v2188
          %v2221 = vsel %vm2157, %v2125, %v2189
          %v2222 = vsel %vm2158, %v2126, %v2190
          %v2223 = vsel %vm2159, %v2127, %v2191
          %v2224 = vld [vmem:[#allocation3] sm:$0xff]
          %v2225 = vld [vmem:[#allocation3 + $0x8] sm:$0xff]
          %v2226 = vld [vmem:[#allocation3 + $0x10] sm:$0xff]
          %v2227 = vld [vmem:[#allocation3 + $0x18] sm:$0xff]
          %v2228 = vld [vmem:[#allocation3 + $0x20] sm:$0xff]
          %v2229 = vld [vmem:[#allocation3 + $0x28] sm:$0xff]
          %v2230 = vld [vmem:[#allocation3 + $0x30] sm:$0xff]
          %v2231 = vld [vmem:[#allocation3 + $0x38] sm:$0xff]
          %v2232 = vld [vmem:[#allocation3 + $0x40] sm:$0xff]
          %v2233 = vld [vmem:[#allocation3 + $0x48] sm:$0xff]
          %v2234 = vld [vmem:[#allocation3 + $0x50] sm:$0xff]
          %v2235 = vld [vmem:[#allocation3 + $0x58] sm:$0xff]
          %v2236 = vld [vmem:[#allocation3 + $0x60] sm:$0xff]
          %v2237 = vld [vmem:[#allocation3 + $0x68] sm:$0xff]
          %v2238 = vld [vmem:[#allocation3 + $0x70] sm:$0xff]
          %v2239 = vld [vmem:[#allocation3 + $0x78] sm:$0xff]
          %v2240 = vld [vmem:[#allocation3 + $0x80] sm:$0xff]
          %v2241 = vld [vmem:[#allocation3 + $0x88] sm:$0xff]
          %v2242 = vld [vmem:[#allocation3 + $0x90] sm:$0xff]
          %v2243 = vld [vmem:[#allocation3 + $0x98] sm:$0xff]
          %v2244 = vld [vmem:[#allocation3 + $0xa0] sm:$0xff]
          %v2245 = vld [vmem:[#allocation3 + $0xa8] sm:$0xff]
          %v2246 = vld [vmem:[#allocation3 + $0xb0] sm:$0xff]
          %v2247 = vld [vmem:[#allocation3 + $0xb8] sm:$0xff]
          %v2248 = vld [vmem:[#allocation3 + $0xc0] sm:$0xff]
          %v2249 = vld [vmem:[#allocation3 + $0xc8] sm:$0xff]
          %v2250 = vld [vmem:[#allocation3 + $0xd0] sm:$0xff]
          %v2251 = vld [vmem:[#allocation3 + $0xd8] sm:$0xff]
          %v2252 = vld [vmem:[#allocation3 + $0xe0] sm:$0xff]
          %v2253 = vld [vmem:[#allocation3 + $0xe8] sm:$0xff]
          %v2254 = vld [vmem:[#allocation3 + $0xf0] sm:$0xff]
          %v2255 = vld [vmem:[#allocation3 + $0xf8] sm:$0xff]
          %vm2256 = vcmp.ge.f32.partialorder %v2224, 0.0
          %vm2257 = vcmp.ge.f32.partialorder %v2225, 0.0
          %vm2258 = vcmp.ge.f32.partialorder %v2226, 0.0
          %vm2259 = vcmp.ge.f32.partialorder %v2227, 0.0
          %vm2260 = vcmp.ge.f32.partialorder %v2228, 0.0
          %vm2261 = vcmp.ge.f32.partialorder %v2229, 0.0
          %vm2262 = vcmp.ge.f32.partialorder %v2230, 0.0
          %vm2263 = vcmp.ge.f32.partialorder %v2231, 0.0
          %vm2264 = vcmp.ge.f32.partialorder %v2232, 0.0
          %vm2265 = vcmp.ge.f32.partialorder %v2233, 0.0
          %vm2266 = vcmp.ge.f32.partialorder %v2234, 0.0
          %vm2267 = vcmp.ge.f32.partialorder %v2235, 0.0
          %vm2268 = vcmp.ge.f32.partialorder %v2236, 0.0
          %vm2269 = vcmp.ge.f32.partialorder %v2237, 0.0
          %vm2270 = vcmp.ge.f32.partialorder %v2238, 0.0
          %vm2271 = vcmp.ge.f32.partialorder %v2239, 0.0
          %vm2272 = vcmp.ge.f32.partialorder %v2240, 0.0
          %vm2273 = vcmp.ge.f32.partialorder %v2241, 0.0
          %vm2274 = vcmp.ge.f32.partialorder %v2242, 0.0
          %vm2275 = vcmp.ge.f32.partialorder %v2243, 0.0
          %vm2276 = vcmp.ge.f32.partialorder %v2244, 0.0
          %vm2277 = vcmp.ge.f32.partialorder %v2245, 0.0
          %vm2278 = vcmp.ge.f32.partialorder %v2246, 0.0
          %vm2279 = vcmp.ge.f32.partialorder %v2247, 0.0
          %vm2280 = vcmp.ge.f32.partialorder %v2248, 0.0
          %vm2281 = vcmp.ge.f32.partialorder %v2249, 0.0
          %vm2282 = vcmp.ge.f32.partialorder %v2250, 0.0
          %vm2283 = vcmp.ge.f32.partialorder %v2251, 0.0
          %vm2284 = vcmp.ge.f32.partialorder %v2252, 0.0
          %vm2285 = vcmp.ge.f32.partialorder %v2253, 0.0
          %vm2286 = vcmp.ge.f32.partialorder %v2254, 0.0
          %vm2287 = vcmp.ge.f32.partialorder %v2255, 0.0
          %v2288 = vmul.f32 %v2224, 0.01
          %v2289 = vmul.f32 %v2225, 0.01
          %v2290 = vmul.f32 %v2226, 0.01
          %v2291 = vmul.f32 %v2227, 0.01
          %v2292 = vmul.f32 %v2228, 0.01
          %v2293 = vmul.f32 %v2229, 0.01
          %v2294 = vmul.f32 %v2230, 0.01
          %v2295 = vmul.f32 %v2231, 0.01
          %v2296 = vmul.f32 %v2232, 0.01
          %v2297 = vmul.f32 %v2233, 0.01
          %v2298 = vmul.f32 %v2234, 0.01
          %v2299 = vmul.f32 %v2235, 0.01
          %v2300 = vmul.f32 %v2236, 0.01
          %v2301 = vmul.f32 %v2237, 0.01
          %v2302 = vmul.f32 %v2238, 0.01
          %v2303 = vmul.f32 %v2239, 0.01
          %v2304 = vmul.f32 %v2240, 0.01
          %v2305 = vmul.f32 %v2241, 0.01
          %v2306 = vmul.f32 %v2242, 0.01
          %v2307 = vmul.f32 %v2243, 0.01
          %v2308 = vmul.f32 %v2244, 0.01
          %v2309 = vmul.f32 %v2245, 0.01
          %v2310 = vmul.f32 %v2246, 0.01
          %v2311 = vmul.f32 %v2247, 0.01
          %v2312 = vmul.f32 %v2248, 0.01
          %v2313 = vmul.f32 %v2249, 0.01
          %v2314 = vmul.f32 %v2250, 0.01
          %v2315 = vmul.f32 %v2251, 0.01
          %v2316 = vmul.f32 %v2252, 0.01
          %v2317 = vmul.f32 %v2253, 0.01
          %v2318 = vmul.f32 %v2254, 0.01
          %v2319 = vmul.f32 %v2255, 0.01
          %v2320 = vsel %vm2256, %v2224, %v2288
          %v2321 = vsel %vm2257, %v2225, %v2289
          %v2322 = vsel %vm2258, %v2226, %v2290
          %v2323 = vsel %vm2259, %v2227, %v2291
          %v2324 = vsel %vm2260, %v2228, %v2292
          %v2325 = vsel %vm2261, %v2229, %v2293
          %v2326 = vsel %vm2262, %v2230, %v2294
          %v2327 = vsel %vm2263, %v2231, %v2295
          %v2328 = vsel %vm2264, %v2232, %v2296
          %v2329 = vsel %vm2265, %v2233, %v2297
          %v2330 = vsel %vm2266, %v2234, %v2298
          %v2331 = vsel %vm2267, %v2235, %v2299
          %v2332 = vsel %vm2268, %v2236, %v2300
          %v2333 = vsel %vm2269, %v2237, %v2301
          %v2334 = vsel %vm2270, %v2238, %v2302
          %v2335 = vsel %vm2271, %v2239, %v2303
          %v2336 = vsel %vm2272, %v2240, %v2304
          %v2337 = vsel %vm2273, %v2241, %v2305
          %v2338 = vsel %vm2274, %v2242, %v2306
          %v2339 = vsel %vm2275, %v2243, %v2307
          %v2340 = vsel %vm2276, %v2244, %v2308
          %v2341 = vsel %vm2277, %v2245, %v2309
          %v2342 = vsel %vm2278, %v2246, %v2310
          %v2343 = vsel %vm2279, %v2247, %v2311
          %v2344 = vsel %vm2280, %v2248, %v2312
          %v2345 = vsel %vm2281, %v2249, %v2313
          %v2346 = vsel %vm2282, %v2250, %v2314
          %v2347 = vsel %vm2283, %v2251, %v2315
          %v2348 = vsel %vm2284, %v2252, %v2316
          %v2349 = vsel %vm2285, %v2253, %v2317
          %v2350 = vsel %vm2286, %v2254, %v2318
          %v2351 = vsel %vm2287, %v2255, %v2319
          %v2352 = vadd.f32 %v2320, %v2192
          %v2353 = vadd.f32 %v2321, %v2193
          %v2354 = vadd.f32 %v2322, %v2194
          %v2355 = vadd.f32 %v2323, %v2195
          %v2356 = vadd.f32 %v2324, %v2196
          %v2357 = vadd.f32 %v2325, %v2197
          %v2358 = vadd.f32 %v2326, %v2198
          %v2359 = vadd.f32 %v2327, %v2199
          %v2360 = vadd.f32 %v2328, %v2200
          %v2361 = vadd.f32 %v2329, %v2201
          %v2362 = vadd.f32 %v2330, %v2202
          %v2363 = vadd.f32 %v2331, %v2203
          %v2364 = vadd.f32 %v2332, %v2204
          %v2365 = vadd.f32 %v2333, %v2205
          %v2366 = vadd.f32 %v2334, %v2206
          %v2367 = vadd.f32 %v2335, %v2207
          %v2368 = vadd.f32 %v2336, %v2208
          %v2369 = vadd.f32 %v2337, %v2209
          %v2370 = vadd.f32 %v2338, %v2210
          %v2371 = vadd.f32 %v2339, %v2211
          %v2372 = vadd.f32 %v2340, %v2212
          %v2373 = vadd.f32 %v2341, %v2213
          %v2374 = vadd.f32 %v2342, %v2214
          %v2375 = vadd.f32 %v2343, %v2215
          %v2376 = vadd.f32 %v2344, %v2216
          %v2377 = vadd.f32 %v2345, %v2217
          %v2378 = vadd.f32 %v2346, %v2218
          %v2379 = vadd.f32 %v2347, %v2219
          %v2380 = vadd.f32 %v2348, %v2220
          %v2381 = vadd.f32 %v2349, %v2221
          %v2382 = vadd.f32 %v2350, %v2222
          %v2383 = vadd.f32 %v2351, %v2223
          %2416 = vrot.lane.b32.xlu0 %v2192, 64
          %v2417 = vpop.permute.xlu0 %2416
          %2418 = vrot.lane.b32.xlu0 %v2193, 64
          %v2419 = vpop.permute.xlu0 %2418
          %2420 = vrot.lane.b32.xlu0 %v2194, 64
          %v2421 = vpop.permute.xlu0 %2420
          %2422 = vrot.lane.b32.xlu0 %v2195, 64
          %v2423 = vpop.permute.xlu0 %2422
          %2424 = vrot.lane.b32.xlu0 %v2196, 64
          %v2425 = vpop.permute.xlu0 %2424
          %2426 = vrot.lane.b32.xlu0 %v2197, 64
          %v2427 = vpop.permute.xlu0 %2426
          %2428 = vrot.lane.b32.xlu0 %v2198, 64
          %v2429 = vpop.permute.xlu0 %2428
          %2430 = vrot.lane.b32.xlu0 %v2199, 64
          %v2431 = vpop.permute.xlu0 %2430
          %2432 = vrot.lane.b32.xlu0 %v2200, 64
          %v2433 = vpop.permute.xlu0 %2432
          %2434 = vrot.lane.b32.xlu0 %v2201, 64
          %v2435 = vpop.permute.xlu0 %2434
          %2436 = vrot.lane.b32.xlu0 %v2202, 64
          %v2437 = vpop.permute.xlu0 %2436
          %2438 = vrot.lane.b32.xlu0 %v2203, 64
          %v2439 = vpop.permute.xlu0 %2438
          %2440 = vrot.lane.b32.xlu0 %v2204, 64
          %v2441 = vpop.permute.xlu0 %2440
          %2442 = vrot.lane.b32.xlu0 %v2205, 64
          %v2443 = vpop.permute.xlu0 %2442
          %2444 = vrot.lane.b32.xlu0 %v2206, 64
          %v2445 = vpop.permute.xlu0 %2444
          %2446 = vrot.lane.b32.xlu0 %v2207, 64
          %v2447 = vpop.permute.xlu0 %2446
          %2448 = vrot.lane.b32.xlu0 %v2208, 64
          %v2449 = vpop.permute.xlu0 %2448
          %2450 = vrot.lane.b32.xlu0 %v2209, 64
          %v2451 = vpop.permute.xlu0 %2450
          %2452 = vrot.lane.b32.xlu0 %v2210, 64
          %v2453 = vpop.permute.xlu0 %2452
          %2454 = vrot.lane.b32.xlu0 %v2211, 64
          %v2455 = vpop.permute.xlu0 %2454
          %2456 = vrot.lane.b32.xlu0 %v2212, 64
          %v2457 = vpop.permute.xlu0 %2456
          %2458 = vrot.lane.b32.xlu0 %v2213, 64
          %v2459 = vpop.permute.xlu0 %2458
          %2460 = vrot.lane.b32.xlu0 %v2214, 64
          %v2461 = vpop.permute.xlu0 %2460
          %2462 = vrot.lane.b32.xlu0 %v2215, 64
          %v2463 = vpop.permute.xlu0 %2462
          %2464 = vrot.lane.b32.xlu0 %v2216, 64
          %v2465 = vpop.permute.xlu0 %2464
          %2466 = vrot.lane.b32.xlu0 %v2217, 64
          %v2467 = vpop.permute.xlu0 %2466
          %2468 = vrot.lane.b32.xlu0 %v2218, 64
          %v2469 = vpop.permute.xlu0 %2468
          %2470 = vrot.lane.b32.xlu0 %v2219, 64
          %v2471 = vpop.permute.xlu0 %2470
          %2472 = vrot.lane.b32.xlu0 %v2220, 64
          %v2473 = vpop.permute.xlu0 %2472
          %2474 = vrot.lane.b32.xlu0 %v2221, 64
          %v2475 = vpop.permute.xlu0 %2474
          %2476 = vrot.lane.b32.xlu0 %v2222, 64
          %v2477 = vpop.permute.xlu0 %2476
          %2478 = vrot.lane.b32.xlu0 %v2223, 64
          %v2479 = vpop.permute.xlu0 %2478
          %v2512 = vsel %vm1450, %v2352, %v2417
          %v2513 = vsel %vm1450, %v2353, %v2419
          %v2514 = vsel %vm1450, %v2354, %v2421
          %v2515 = vsel %vm1450, %v2355, %v2423
          %v2516 = vsel %vm1450, %v2356, %v2425
          %v2517 = vsel %vm1450, %v2357, %v2427
          %v2518 = vsel %vm1450, %v2358, %v2429
          %v2519 = vsel %vm1450, %v2359, %v2431
          %v2520 = vsel %vm1450, %v2360, %v2433
          %v2521 = vsel %vm1450, %v2361, %v2435
          %v2522 = vsel %vm1450, %v2362, %v2437
          %v2523 = vsel %vm1450, %v2363, %v2439
          %v2524 = vsel %vm1450, %v2364, %v2441
          %v2525 = vsel %vm1450, %v2365, %v2443
          %v2526 = vsel %vm1450, %v2366, %v2445
          %v2527 = vsel %vm1450, %v2367, %v2447
          %v2528 = vsel %vm1450, %v2368, %v2449
          %v2529 = vsel %vm1450, %v2369, %v2451
          %v2530 = vsel %vm1450, %v2370, %v2453
          %v2531 = vsel %vm1450, %v2371, %v2455
          %v2532 = vsel %vm1450, %v2372, %v2457
          %v2533 = vsel %vm1450, %v2373, %v2459
          %v2534 = vsel %vm1450, %v2374, %v2461
          %v2535 = vsel %vm1450, %v2375, %v2463
          %v2536 = vsel %vm1450, %v2376, %v2465
          %v2537 = vsel %vm1450, %v2377, %v2467
          %v2538 = vsel %vm1450, %v2378, %v2469
          %v2539 = vsel %vm1450, %v2379, %v2471
          %v2540 = vsel %vm1450, %v2380, %v2473
          %v2541 = vsel %vm1450, %v2381, %v2475
          %v2542 = vsel %vm1450, %v2382, %v2477
          %v2543 = vsel %vm1450, %v2383, %v2479
          %2544 = vst [vmem:[%s277] sm:$0xff] %v2512
          %2545 = vst [vmem:[%s277 + $0x8] sm:$0xff] %v2513
          %2546 = vst [vmem:[%s277 + $0x10] sm:$0xff] %v2514
          %2547 = vst [vmem:[%s277 + $0x18] sm:$0xff] %v2515
          %2548 = vst [vmem:[%s277 + $0x20] sm:$0xff] %v2516
          %2549 = vst [vmem:[%s277 + $0x28] sm:$0xff] %v2517
          %2550 = vst [vmem:[%s277 + $0x30] sm:$0xff] %v2518
          %2551 = vst [vmem:[%s277 + $0x38] sm:$0xff] %v2519
          %2552 = vst [vmem:[%s277 + $0x40] sm:$0xff] %v2520
          %2553 = vst [vmem:[%s277 + $0x48] sm:$0xff] %v2521
          %2554 = vst [vmem:[%s277 + $0x50] sm:$0xff] %v2522
          %2555 = vst [vmem:[%s277 + $0x58] sm:$0xff] %v2523
          %2556 = vst [vmem:[%s277 + $0x60] sm:$0xff] %v2524
          %2557 = vst [vmem:[%s277 + $0x68] sm:$0xff] %v2525
          %2558 = vst [vmem:[%s277 + $0x70] sm:$0xff] %v2526
          %2559 = vst [vmem:[%s277 + $0x78] sm:$0xff] %v2527
          %2560 = vst [vmem:[%s277 + $0x80] sm:$0xff] %v2528
          %2561 = vst [vmem:[%s277 + $0x88] sm:$0xff] %v2529
          %2562 = vst [vmem:[%s277 + $0x90] sm:$0xff] %v2530
          %2563 = vst [vmem:[%s277 + $0x98] sm:$0xff] %v2531
          %2564 = vst [vmem:[%s277 + $0xa0] sm:$0xff] %v2532
          %2565 = vst [vmem:[%s277 + $0xa8] sm:$0xff] %v2533
          %2566 = vst [vmem:[%s277 + $0xb0] sm:$0xff] %v2534
          %2567 = vst [vmem:[%s277 + $0xb8] sm:$0xff] %v2535
          %2568 = vst [vmem:[%s277 + $0xc0] sm:$0xff] %v2536
          %2569 = vst [vmem:[%s277 + $0xc8] sm:$0xff] %v2537
          %2570 = vst [vmem:[%s277 + $0xd0] sm:$0xff] %v2538
          %2571 = vst [vmem:[%s277 + $0xd8] sm:$0xff] %v2539
          %2572 = vst [vmem:[%s277 + $0xe0] sm:$0xff] %v2540
          %2573 = vst [vmem:[%s277 + $0xe8] sm:$0xff] %v2541
          %2574 = vst [vmem:[%s277 + $0xf0] sm:$0xff] %v2542
          %2575 = vst [vmem:[%s277 + $0xf8] sm:$0xff] %v2543
        $region52: #{tpu_custom_call.1} parent=35 // pred_fallthru
          _
        %s2576 = sand.u32 %s142, 1
        %s2577 = scalar_lea.sflag [#allocation6], %s2576
        %s2578 = sand.u32 %s142, 1
        %s2579 = smul.addr %s2578, 256
        %s2580 = scalar_lea.vmem [#allocation9], %s2579
        // Predicated region
        $region53: #{tpu_custom_call.1} parent=35 // pred_check
          %p2581 = pneg %p152
        $region54: #{tpu_custom_call.1} parent=35 // pred_check_branch
          %2583 = sbr.rel (%p2581) target = $region56
        $region55: #{tpu_custom_call.1} parent=35 // pred_region
          %s2584 = smul.u32 32, %s28
          %s2586 = ssub.s32 4096, 4096
          %2587 = vsyncadd %s2577, %s2586
          %s2588 = smul.addr %s2584, 128
          %s2589 = scalar_lea.hbm %s4, %s2588
          %s2590 = sshll.u32 %s2580, 4
          %s2591 = int_to_ptr.vmem [resolvable:$true] %s2590
          %2596 = dma.vmem_to_hbm [thread:$0]  %s2591, 4096, %s2589, %s2577, 128, 128, 8
        $region56: #{tpu_custom_call.1} parent=35 // pred_fallthru
          _
      $region36: #{tpu_custom_call.1} parent=5 // pred_fallthru
        _
      %p2597 = scmp.le.s32.totalorder 2, %s19
      // Predicated region
      $region57: #{tpu_custom_call.1} parent=5 // pred_check
        %p2598 = pneg %p2597
      $region58: #{tpu_custom_call.1} parent=5 // pred_check_branch
        %2600 = sbr.rel (%p2598) target = $region60
      $region59: #{tpu_custom_call.1} parent=5 // pred_region
        %s2601 = ssub.s32 %s19, 2
        // Predicated region
        $region61: #{tpu_custom_call.1} parent=59 // pred_check
          %p2602 = pneg %p158
        $region62: #{tpu_custom_call.1} parent=59 // pred_check_branch
          %2604 = sbr.rel (%p2602) target = $region64
        $region63: #{tpu_custom_call.1} parent=59 // pred_region
          %s2605 = sand.u32 %s143, 1
          %s2606 = scalar_lea.sflag [#allocation6], %s2605
          %s2607 = sand.u32 %s143, 1
          %s2608 = smul.addr %s2607, 256
          %s2609 = scalar_lea.vmem [#allocation9], %s2608
          %2610 = dma.done %s2606, 4096
        $region64: #{tpu_custom_call.1} parent=59 // pred_fallthru
          _
      $region60: #{tpu_custom_call.1} parent=5 // pred_fallthru
        _
    $region6: #{tpu_custom_call.1} parent=1 // loop_footer
      %s23 = sadd.s32 1, %s19
    $region7: #{tpu_custom_call.1} parent=1 // loop_footer_branch
      %18 = sbr.rel target = $region3
    $region8: #{tpu_custom_call.1} parent=1 // loop_exit
      _
    %2611 = vsyncpa [#allocation5], 1
    %s2612 = scalar_lea.sflag [#allocation5], 1
    %2613 = vsyncpa %s2612, 1
    %2614 = vsyncpa [#allocation8], 1
    %s2615 = scalar_lea.sflag [#allocation8], 1
    %2616 = vsyncpa %s2615, 1
    %2617 = vsyncpa [#allocation6], 1
    %s2618 = scalar_lea.sflag [#allocation6], 1
    %2619 = vsyncpa %s2618, 1

</llo_original>
